<compile_context>
chip_gen: v7x
topology: tpu7x:2x2x1
jax: 0.10.0
libtpu: 0.0.40
codegen_flags: <defaults>
</compile_context>

<pallas_src>
import functools
import math

import jax
import jax.numpy as jnp
from jax.experimental import pallas as pl
from jax.experimental.pallas import tpu as pltpu

_LANE = 128
_SUBLANE = 8
_VMEM_TILE_BUDGET = 40 * 1024 * 1024   # working-set ceiling used when picking the batch tile
_VMEM_REQUEST_CAP = 60 * 1024 * 1024   # never request more scoped VMEM than this (v7x: 64 MiB)


def _round_up(x, m):
    return (x + m - 1) // m * m


def _tensorcores_per_chip():
    """Best-effort TensorCores behind one Pallas grid: 2 on v4/v5p (megacore) and v7x,
    1 on v2/v3/v5e/v6e.  Unknown kinds default to 1 (only costs one extra grid step)."""
    try:
        kind = jax.devices()[0].device_kind.lower()
    except Exception:
        return 1
    if any(s in kind for s in ("lite", "v5e", "v6e", "v2", "v3")):
        return 1
    if any(s in kind for s in ("v4", "v5p", "v5", "v7", "tpu7")):
        return 2
    return 1


# ----------------------------------------------------------------------------- kernel bodies

def _run_layers(h, param_refs, final_relu, compute_dtype):
    """h: (bt, width) in compute_dtype.  param_refs: interleaved (w0, b0, w1, b1, ...) Refs."""
    n = len(param_refs) // 2
    for l in range(n):
        w = param_refs[2 * l][...]                     # (fan_in_pad, fan_out_pad) compute_dtype
        b = param_refs[2 * l + 1][...]                 # (1, fan_out_pad) f32
        acc = jnp.dot(h, w, preferred_element_type=jnp.float32) + b   # MXU -> f32 accumulator
        if l < n - 1 or final_relu:
            # Keep activations in compute_dtype between layers (halves vld/vst + VMEM traffic).
            h = jnp.maximum(acc, 0.0).astype(compute_dtype)
        else:
            h = acc                                    # final layer stays on the f32 accumulator
    return h


def _mlp_kernel(x_ref, *refs, final_relu, compute_dtype):
    """Plain head: all layers fused on one resident batch tile."""
    out_ref = refs[-1]
    h = _run_layers(x_ref[...].astype(compute_dtype), refs[:-1], final_relu, compute_dtype)
    out_ref[...] = h.astype(out_ref.dtype)


def _dueling_kernel(x_ref, *refs, n_trunk, n_adv, adv_dim, compute_dtype):
    """Trunk + advantage head + value head + dueling combine, all in one kernel."""
    out_ref = refs[-1]
    params = refs[:-1]
    trunk = params[: 2 * n_trunk]
    adv_p = params[2 * n_trunk: 2 * (n_trunk + n_adv)]
    val_p = params[2 * (n_trunk + n_adv):]
    h = _run_layers(x_ref[...].astype(compute_dtype), trunk, True, compute_dtype)
    adv = _run_layers(h, adv_p, False, compute_dtype)   # (bt, adv_pad) f32, padded lanes are 0
    val = _run_layers(h, val_p, False, compute_dtype)   # (bt, val_pad) f32, only lane 0 is real
    # Padded adv lanes are exactly zero, so a full-width sum equals the true-action sum.
    adv_mean = jnp.sum(adv, axis=-1, keepdims=True) * (1.0 / adv_dim)
    out_ref[...] = (val[:, 0:1] + adv - adv_mean).astype(out_ref.dtype)


# ---------------------------------------------------------------------------- host-side setup

def _pad_layers(layers, in_width, compute_dtype):
    """Zero-pad every fan_out to a 128-lane multiple and the matching fan_in rows of the next
    layer.  Zeros propagate exactly through bias-add and ReLU, so the math is unchanged."""
    padded, cur = [], in_width
    for w, b in layers:
        fan_in, fan_out = w.shape
        out_pad = _round_up(fan_out, _LANE)
        w = jnp.pad(w, ((0, cur - fan_in), (0, out_pad - fan_out))).astype(compute_dtype)
        b = jnp.pad(b.reshape(1, fan_out), ((0, 0), (0, out_pad - fan_out))).astype(jnp.float32)
        padded.append((w, b))
        cur = out_pad
    return padded, cur


def _pick_batch_tile(B, batch_tile, n_cores, est_fn):
    b_al = _round_up(max(B, 1), _SUBLANE)
    if n_cores > 1 and B >= 2 * _SUBLANE:
        # >= n_cores grid steps so the "parallel" batch axis keeps every TensorCore busy.
        bt = _round_up(pl.cdiv(B, n_cores), _SUBLANE)
    else:
        # Single TensorCore: the grid is a sequential loop, so one big step minimizes the
        # ~0.35us/step pipeline overhead (weights stay resident either way).
        bt = b_al
    if batch_tile is not None:
        bt = min(bt, max(_SUBLANE, _round_up(batch_tile, _SUBLANE)))
    bt = max(_SUBLANE, min(bt, b_al))
    while bt > _SUBLANE and est_fn(bt) > _VMEM_TILE_BUDGET:
        bt = max(_SUBLANE, _round_up(bt // 2, _SUBLANE))
    return bt


def _launch(kernel, x, padded_layers, out_pad, *, batch_tile, vmem_limit_bytes):
    """Build specs / grid, derive VMEM budget and launch one fused pallas_call."""
    B, in_dim = x.shape
    out_dtype = x.dtype
    out_isz = out_dtype.itemsize

    def est_vmem(bt, buffered_params=True):
        nbuf = 1 if buffered_params else 2
        xb = 2 * bt * in_dim * x.dtype.itemsize                    # double-buffered input tile
        ob = 2 * bt * out_pad * out_isz                            # double-buffered output tile
        pb = nbuf * sum(w.size * w.dtype.itemsize + b.size * b.dtype.itemsize
                        for w, b in padded_layers)
        widest = max([w.shape[1] for w, _ in padded_layers] + [in_dim])
        act = 2 * bt * widest * 4                                  # live f32 acc + activation
        return xb + ob + pb + act

    bt = _pick_batch_tile(B, batch_tile, _tensorcores_per_chip(), est_vmem)
    grid = (pl.cdiv(B, bt),)
    # NOTE: if B is not a multiple of bt, the last tile computes on out-of-range rows; those
    # rows are never read back (wasted work only).

    if vmem_limit_bytes is None and est_vmem(bt) > 12 * 1024 * 1024:
        # Derive the scoped-VMEM request from the real working set (matters once hidden_units
        # scales); stay well under v7x's 64 MiB physical VMEM per TensorCore.
        vmem_limit_bytes = min(_VMEM_REQUEST_CAP,
                               _round_up(int(1.5 * est_vmem(bt)) + (4 << 20), 1 << 20))

    flops = 2 * B * sum(w.shape[0] * w.shape[1] for w, _ in padded_layers)
    param_bytes = sum(w.size * w.dtype.itemsize + b.size * b.dtype.itemsize
                      for w, b in padded_layers)
    bytes_accessed = int(x.size * x.dtype.itemsize + param_bytes + B * out_pad * out_isz)

    flat_params = [p for wb in padded_layers for p in wb]

    def call(buffered_params):
        in_specs = [pl.BlockSpec((bt, in_dim), lambda i: (i, 0))]
        for w, b in padded_layers:
            if buffered_params:
                # Grid-invariant params (constant index_map): one resident buffer, no wasted
                # double-buffer VMEM.
                in_specs.append(pl.BlockSpec(w.shape, lambda i: (0, 0),
                                             pipeline_mode=pl.Buffered(1)))
                in_specs.append(pl.BlockSpec(b.shape, lambda i: (0, 0),
                                             pipeline_mode=pl.Buffered(1)))
            else:
                in_specs.append(pl.BlockSpec(w.shape, lambda i: (0, 0)))
                in_specs.append(pl.BlockSpec(b.shape, lambda i: (0, 0)))
        return pl.pallas_call(
            kernel,
            out_shape=jax.ShapeDtypeStruct((B, out_pad), out_dtype),
            grid=grid,
            in_specs=in_specs,
            out_specs=pl.BlockSpec((bt, out_pad), lambda i: (i, 0)),
            compiler_params=pltpu.CompilerParams(
                dimension_semantics=("parallel",),     # batch tiles shard across TensorCores
                vmem_limit_bytes=vmem_limit_bytes,
            ),
            cost_estimate=pl.CostEstimate(
                flops=flops, transcendentals=0, bytes_accessed=bytes_accessed),
        )(x, *flat_params)

    # TODO(synk): for hidden_units >= ~2048, add a fan_out tiling grid axis ("arbitrary") so
    # per-layer weight blocks stream HBM->VMEM instead of staying fully resident.
    if hasattr(pl, "Buffered"):
        try:
            return call(True)
        except Exception:
            pass            # older jax without pipeline_mode support -> default double buffer
    return call(False)


def complex_mlp_forward(x, params, *, batch_tile=None, compute_dtype=jnp.bfloat16,
                        vmem_limit_bytes=None):
    """Forward pass of ComplexMLP.

    params: dict from init_complex_mlp_params():
      non-dueling: {"trunk": [(W, b), ...], "out": [(W, b)]}
      dueling:     {"trunk": [(W, b), ...], "adv": [(W, b), (W, b)], "val": [(W, b), (W, b)]}
    NOTE: the bf16 fast path (default compute_dtype) introduces ~1e-2 relative error vs the
    f32 PyTorch module; pass compute_dtype=jnp.float32 for exact parity.
    """
    B = x.shape[0]
    x2d = x.reshape(B, -1)                               # torch.flatten(x, start_dim=1)
    in_dim = x2d.shape[1]

    if "out" in params:                                  # plain head: one fused kernel
        layers = list(params["trunk"]) + list(params["out"])
        padded, _ = _pad_layers(layers, in_dim, compute_dtype)
        out_true = layers[-1][0].shape[1]
        out_pad = padded[-1][0].shape[1]
        kernel = functools.partial(_mlp_kernel, final_relu=False, compute_dtype=compute_dtype)
        y = _launch(kernel, x2d, padded, out_pad,
                    batch_tile=batch_tile, vmem_limit_bytes=vmem_limit_bytes)
        return y[:, :out_true]

    # Dueling: trunk + both heads + the combine fused into a single pallas_call (no extra
    # kernel launches, no HBM round-trips of the trunk activations).
    trunk, adv, val = list(params["trunk"]), list(params["adv"]), list(params["val"])
    t_pad, h_width = _pad_layers(trunk, in_dim, compute_dtype)
    a_pad, _ = _pad_layers(adv, h_width, compute_dtype)
    v_pad, _ = _pad_layers(val, h_width, compute_dtype)
    adv_true = adv[-1][0].shape[1]
    out_pad = a_pad[-1][0].shape[1]
    # TODO(synk): the fused combine assumes atoms == 1 (value head width 1); for atoms > 1 the
    # mean must be taken per-atom over the action dimension after a (B, out_dim, atoms) reshape.
    assert val[-1][0].shape[1] == 1
    kernel = functools.partial(_dueling_kernel, n_trunk=len(trunk), n_adv=len(adv),
                               adv_dim=adv_true, compute_dtype=compute_dtype)
    y = _launch(kernel, x2d, t_pad + a_pad + v_pad, out_pad,
                batch_tile=batch_tile, vmem_limit_bytes=vmem_limit_bytes)
    return y[:, :adv_true]


# ------------------------------------------------------------------------ params / reference

def _init_linear(key, fan_in, fan_out):
    """PyTorch nn.Linear default init: U(-1/sqrt(fan_in), 1/sqrt(fan_in)) for W and b."""
    kw, kb = jax.random.split(key)
    bound = 1.0 / math.sqrt(fan_in)
    w = jax.random.uniform(kw, (fan_in, fan_out), jnp.float32, -bound, bound)
    b = jax.random.uniform(kb, (fan_out,), jnp.float32, -bound, bound)
    return w, b


def init_complex_mlp_params(key, in_dim, out_dim, hidden_units=256, num_hidden_layers=1,
                            dueling=False, atoms=1):
    flat_in = int(math.prod(in_dim)) if isinstance(in_dim, (tuple, list)) else int(in_dim)
    if dueling:
        num_hidden_layers = max(num_hidden_layers - 1, 2)
    keys = jax.random.split(key, num_hidden_layers + 5)
    trunk = [_init_linear(keys[0], flat_in, hidden_units)]
    for i in range(num_hidden_layers - 1):
        trunk.append(_init_linear(keys[1 + i], hidden_units, hidden_units))
    if dueling:
        k = num_hidden_layers
        adv = [_init_linear(keys[k], hidden_units, hidden_units),
               _init_linear(keys[k + 1], hidden_units, out_dim * atoms)]
        val = [_init_linear(keys[k + 2], hidden_units, hidden_units),
               _init_linear(keys[k + 3], hidden_units, 1 * atoms)]
        return {"trunk": trunk, "adv": adv, "val": val}
    out = [_init_linear(keys[num_hidden_layers], hidden_units, out_dim * atoms)]
    return {"trunk": trunk, "out": out}


def sample_noisy_params(key, params, std_init=0.5):
    """Training-mode NoisyLinear: W_eff = mu_W + sigma_W * outer(eps_in, eps_out),
    b_eff = mu_b + sigma_b * eps_out with factored sign(x)*sqrt(|x|) noise.  Noise is sampled
    host-side; the kernel always consumes effective weights."""
    def scale_noise(k, n):
        e = jax.random.normal(k, (n,))
        return jnp.sign(e) * jnp.sqrt(jnp.abs(e))

    def noisy_layer(k, wb):
        w, b = wb
        fan_in, fan_out = w.shape
        k_in, k_out = jax.random.split(k)
        eps_in, eps_out = scale_noise(k_in, fan_in), scale_noise(k_out, fan_out)
        sig_w = std_init / math.sqrt(fan_in)
        sig_b = std_init / math.sqrt(fan_out)
        return w + sig_w * jnp.outer(eps_in, eps_out), b + sig_b * eps_out

    out = {}
    for i, name in enumerate(sorted(params)):
        layers = params[name]
        keys = jax.random.split(jax.random.fold_in(key, i), len(layers))
        out[name] = [noisy_layer(k, wb) for k, wb in zip(keys, layers)]
    return out


def complex_mlp_reference(x, params):
    """Pure-JAX reference mirroring ComplexMLP.forward."""
    def run(h, layers, final_relu):
        for l, (w, b) in enumerate(layers):
            h = h @ w + b
            if l < len(layers) - 1 or final_relu:
                h = jnp.maximum(h, 0.0)
        return h

    h = x.reshape(x.shape[0], -1)
    if "out" in params:
        return run(h, list(params["trunk"]) + list(params["out"]), False)
    h = run(h, params["trunk"], True)
    adv = run(h, params["adv"], False)
    val = run(h, params["val"], False)
    return val + adv - jnp.mean(adv, axis=1, keepdims=True)


if __name__ == "__main__":
    # ComplexMLP(in_dim=(4, 4), out_dim=4, hidden_units=32, num_hidden_layers=2)
    batch, in_shape, out_dim = 256, (4, 4), 4
    hidden_units, num_hidden_layers = 32, 2

    key = jax.random.PRNGKey(0)
    kx, kp, kpd, kn = jax.random.split(key, 4)
    x = jax.random.normal(kx, (batch,) + in_shape, jnp.float32)

    # 1) Plain head (noisy=False, dueling=False), f32 compute: strict check vs reference.
    params = init_complex_mlp_params(kp, in_shape, out_dim, hidden_units, num_hidden_layers)
    out_f32 = jax.block_until_ready(complex_mlp_forward(x, params, compute_dtype=jnp.float32))
    ref = complex_mlp_reference(x, params)
    assert out_f32.shape == (batch, out_dim)
    assert jnp.allclose(out_f32, ref, atol=1e-5, rtol=1e-5)

    # 2) Same params on the fast path: bf16 MXU operands/activations, f32 accumulation.
    out_bf16 = jax.block_until_ready(complex_mlp_forward(x, params, compute_dtype=jnp.bfloat16))
    assert jnp.allclose(out_bf16, ref, atol=5e-2, rtol=5e-2)

    # 3) Dueling heads + training-mode noisy layers: trunk+adv+val+combine in ONE kernel.
    d_params = init_complex_mlp_params(kpd, in_shape, out_dim, hidden_units,
                                       num_hidden_layers, dueling=True)
    d_params = sample_noisy_params(kn, d_params, std_init=0.5)
    out_duel = jax.block_until_ready(
        complex_mlp_forward(x, d_params, compute_dtype=jnp.float32))
    ref_duel = complex_mlp_reference(x, d_params)
    assert out_duel.shape == (batch, out_dim)
    assert jnp.allclose(out_duel, ref_duel, atol=1e-5, rtol=1e-5)

    print("KERNEL_OK")
</pallas_src>

<mosaic_0001>
module attributes {stable_mosaic.version = 11 : i64} {
  func.func @_mlp_kernel(%arg0: i32, %arg1: memref<256x16xf32, #tpu.memory_space<vmem>>, %arg2: memref<16x128xf32, #tpu.memory_space<vmem>>, %arg3: memref<1x128xf32, #tpu.memory_space<vmem>>, %arg4: memref<128x128xf32, #tpu.memory_space<vmem>>, %arg5: memref<1x128xf32, #tpu.memory_space<vmem>>, %arg6: memref<128x128xf32, #tpu.memory_space<vmem>>, %arg7: memref<1x128xf32, #tpu.memory_space<vmem>>, %arg8: memref<256x128xf32, #tpu.memory_space<vmem>>) attributes {dimension_semantics = [#tpu.dimension_semantics<parallel>], iteration_bounds = array<i64: 1>, scalar_prefetch = 0 : i64, scratch_operands = 0 : i64, tpu.core_type = #tpu.core_type<tc>, window_params = [{transform_indices = @transform_0, window_bounds = array<i64: 256, 16>}, {pipeline_mode = #tpu.pipeline_mode<synchronous>, transform_indices = @transform_1, window_bounds = array<i64: 16, 128>}, {pipeline_mode = #tpu.pipeline_mode<synchronous>, transform_indices = @transform_2, window_bounds = array<i64: 1, 128>}, {pipeline_mode = #tpu.pipeline_mode<synchronous>, transform_indices = @transform_3, window_bounds = array<i64: 128, 128>}, {pipeline_mode = #tpu.pipeline_mode<synchronous>, transform_indices = @transform_4, window_bounds = array<i64: 1, 128>}, {pipeline_mode = #tpu.pipeline_mode<synchronous>, transform_indices = @transform_5, window_bounds = array<i64: 128, 128>}, {pipeline_mode = #tpu.pipeline_mode<synchronous>, transform_indices = @transform_6, window_bounds = array<i64: 1, 128>}, {transform_indices = @transform_7, window_bounds = array<i64: 256, 128>}]} {
    %c0 = arith.constant 0 : index
    %c0_0 = arith.constant 0 : index
    %0 = vector.load %arg1[%c0, %c0_0] : memref<256x16xf32, #tpu.memory_space<vmem>>, vector<256x16xf32>
    %c0_1 = arith.constant 0 : index
    %c0_2 = arith.constant 0 : index
    %1 = vector.load %arg2[%c0_1, %c0_2] : memref<16x128xf32, #tpu.memory_space<vmem>>, vector<16x128xf32>
    %c0_3 = arith.constant 0 : index
    %c0_4 = arith.constant 0 : index
    %2 = vector.load %arg3[%c0_3, %c0_4] : memref<1x128xf32, #tpu.memory_space<vmem>>, vector<1x128xf32>
    %cst = arith.constant dense<0.000000e+00> : vector<256x128xf32>
    %3 = tpu.matmul %0, %1, %cst {dimension_numbers = #tpu.dot_dimension_numbers<[1], [0], [0], [1], [0, 0, 1, 1], [], []>} : vector<256x16xf32>, vector<16x128xf32>, vector<256x128xf32> -> vector<256x128xf32>
    %4 = vector.broadcast %2 : vector<1x128xf32> to vector<256x128xf32>
    %5 = arith.addf %3, %4 : vector<256x128xf32>
    %cst_5 = arith.constant 0.000000e+00 : f32
    %6 = vector.broadcast %cst_5 : f32 to vector<256x128xf32>
    %7 = arith.maximumf %5, %6 : vector<256x128xf32>
    %c0_6 = arith.constant 0 : index
    %c0_7 = arith.constant 0 : index
    %8 = vector.load %arg4[%c0_6, %c0_7] : memref<128x128xf32, #tpu.memory_space<vmem>>, vector<128x128xf32>
    %c0_8 = arith.constant 0 : index
    %c0_9 = arith.constant 0 : index
    %9 = vector.load %arg5[%c0_8, %c0_9] : memref<1x128xf32, #tpu.memory_space<vmem>>, vector<1x128xf32>
    %cst_10 = arith.constant dense<0.000000e+00> : vector<256x128xf32>
    %10 = tpu.matmul %7, %8, %cst_10 {dimension_numbers = #tpu.dot_dimension_numbers<[1], [0], [0], [1], [0, 0, 1, 1], [], []>} : vector<256x128xf32>, vector<128x128xf32>, vector<256x128xf32> -> vector<256x128xf32>
    %11 = vector.broadcast %9 : vector<1x128xf32> to vector<256x128xf32>
    %12 = arith.addf %10, %11 : vector<256x128xf32>
    %cst_11 = arith.constant 0.000000e+00 : f32
    %13 = vector.broadcast %cst_11 : f32 to vector<256x128xf32>
    %14 = arith.maximumf %12, %13 : vector<256x128xf32>
    %c0_12 = arith.constant 0 : index
    %c0_13 = arith.constant 0 : index
    %15 = vector.load %arg6[%c0_12, %c0_13] : memref<128x128xf32, #tpu.memory_space<vmem>>, vector<128x128xf32>
    %c0_14 = arith.constant 0 : index
    %c0_15 = arith.constant 0 : index
    %16 = vector.load %arg7[%c0_14, %c0_15] : memref<1x128xf32, #tpu.memory_space<vmem>>, vector<1x128xf32>
    %cst_16 = arith.constant dense<0.000000e+00> : vector<256x128xf32>
    %17 = tpu.matmul %14, %15, %cst_16 {dimension_numbers = #tpu.dot_dimension_numbers<[1], [0], [0], [1], [0, 0, 1, 1], [], []>} : vector<256x128xf32>, vector<128x128xf32>, vector<256x128xf32> -> vector<256x128xf32>
    %18 = vector.broadcast %16 : vector<1x128xf32> to vector<256x128xf32>
    %19 = arith.addf %17, %18 : vector<256x128xf32>
    %c0_17 = arith.constant 0 : index
    %c0_18 = arith.constant 0 : index
    %20 = vector.load %arg8[%c0_17, %c0_18] : memref<256x128xf32, #tpu.memory_space<vmem>>, vector<256x128xf32>
    tpu.vector_store %arg8[%c0_17, %c0_18], %19 {strides = array<i32>} : memref<256x128xf32, #tpu.memory_space<vmem>>, vector<256x128xf32>,
    return
  }
  func.func @transform_0(%arg0: i32) -> (i32, i32) {
    %c0_i32 = arith.constant 0 : i32
    %c0_i32_0 = arith.constant 0 : i32
    return %arg0, %c0_i32 : i32, i32
  }
  func.func @transform_1(%arg0: i32) -> (i32, i32) {
    %c0_i32 = arith.constant 0 : i32
    %c0_i32_0 = arith.constant 0 : i32
    %c0_i32_1 = arith.constant 0 : i32
    return %c0_i32, %c0_i32_0 : i32, i32
  }
  func.func @transform_2(%arg0: i32) -> (i32, i32) {
    %c0_i32 = arith.constant 0 : i32
    %c0_i32_0 = arith.constant 0 : i32
    %c0_i32_1 = arith.constant 0 : i32
    return %c0_i32, %c0_i32_0 : i32, i32
  }
  func.func @transform_3(%arg0: i32) -> (i32, i32) {
    %c0_i32 = arith.constant 0 : i32
    %c0_i32_0 = arith.constant 0 : i32
    %c0_i32_1 = arith.constant 0 : i32
    return %c0_i32, %c0_i32_0 : i32, i32
  }
  func.func @transform_4(%arg0: i32) -> (i32, i32) {
    %c0_i32 = arith.constant 0 : i32
    %c0_i32_0 = arith.constant 0 : i32
    %c0_i32_1 = arith.constant 0 : i32
    return %c0_i32, %c0_i32_0 : i32, i32
  }
  func.func @transform_5(%arg0: i32) -> (i32, i32) {
    %c0_i32 = arith.constant 0 : i32
    %c0_i32_0 = arith.constant 0 : i32
    %c0_i32_1 = arith.constant 0 : i32
    return %c0_i32, %c0_i32_0 : i32, i32
  }
  func.func @transform_6(%arg0: i32) -> (i32, i32) {
    %c0_i32 = arith.constant 0 : i32
    %c0_i32_0 = arith.constant 0 : i32
    %c0_i32_1 = arith.constant 0 : i32
    return %c0_i32, %c0_i32_0 : i32, i32
  }
  func.func @transform_7(%arg0: i32) -> (i32, i32) {
    %c0_i32 = arith.constant 0 : i32
    %c0_i32_0 = arith.constant 0 : i32
    return %arg0, %c0_i32 : i32, i32
  }
}

module attributes {stable_mosaic.version = 11 : i64} {
  func.func @_mlp_kernel(%arg0: i32, %arg1: memref<256x16xf32, #tpu.memory_space<vmem>>, %arg2: memref<16x128xf32, #tpu.memory_space<vmem>>, %arg3: memref<1x128xf32, #tpu.memory_space<vmem>>, %arg4: memref<128x128xf32, #tpu.memory_space<vmem>>, %arg5: memref<1x128xf32, #tpu.memory_space<vmem>>, %arg6: memref<128x128xf32, #tpu.memory_space<vmem>>, %arg7: memref<1x128xf32, #tpu.memory_space<vmem>>, %arg8: memref<256x128xf32, #tpu.memory_space<vmem>>) attributes {dimension_semantics = [#tpu.dimension_semantics<parallel>], iteration_bounds = array<i64: 1>, scalar_prefetch = 0 : i64, scratch_operands = 0 : i64, tpu.core_type = #tpu.core_type<tc>, window_params = [{transform_indices = @transform_0, window_bounds = array<i64: 256, 16>}, {pipeline_mode = #tpu.pipeline_mode<synchronous>, transform_indices = @transform_1, window_bounds = array<i64: 16, 128>}, {pipeline_mode = #tpu.pipeline_mode<synchronous>, transform_indices = @transform_2, window_bounds = array<i64: 1, 128>}, {pipeline_mode = #tpu.pipeline_mode<synchronous>, transform_indices = @transform_3, window_bounds = array<i64: 128, 128>}, {pipeline_mode = #tpu.pipeline_mode<synchronous>, transform_indices = @transform_4, window_bounds = array<i64: 1, 128>}, {pipeline_mode = #tpu.pipeline_mode<synchronous>, transform_indices = @transform_5, window_bounds = array<i64: 128, 128>}, {pipeline_mode = #tpu.pipeline_mode<synchronous>, transform_indices = @transform_6, window_bounds = array<i64: 1, 128>}, {transform_indices = @transform_7, window_bounds = array<i64: 256, 128>}]} {
    %c0 = arith.constant 0 : index
    %c0_0 = arith.constant 0 : index
    %0 = vector.load %arg1[%c0, %c0_0] : memref<256x16xf32, #tpu.memory_space<vmem>>, vector<256x16xf32>
    %c0_1 = arith.constant 0 : index
    %c0_2 = arith.constant 0 : index
    %1 = vector.load %arg2[%c0_1, %c0_2] : memref<16x128xf32, #tpu.memory_space<vmem>>, vector<16x128xf32>
    %c0_3 = arith.constant 0 : index
    %c0_4 = arith.constant 0 : index
    %2 = vector.load %arg3[%c0_3, %c0_4] : memref<1x128xf32, #tpu.memory_space<vmem>>, vector<1x128xf32>
    %cst = arith.constant dense<0.000000e+00> : vector<256x128xf32>
    %3 = tpu.matmul %0, %1, %cst {dimension_numbers = #tpu.dot_dimension_numbers<[1], [0], [0], [1], [0, 0, 1, 1], [], []>} : vector<256x16xf32>, vector<16x128xf32>, vector<256x128xf32> -> vector<256x128xf32>
    %4 = vector.broadcast %2 : vector<1x128xf32> to vector<256x128xf32>
    %5 = arith.addf %3, %4 : vector<256x128xf32>
    %cst_5 = arith.constant 0.000000e+00 : f32
    %6 = vector.broadcast %cst_5 : f32 to vector<256x128xf32>
    %7 = arith.maximumf %5, %6 : vector<256x128xf32>
    %c0_6 = arith.constant 0 : index
    %c0_7 = arith.constant 0 : index
    %8 = vector.load %arg4[%c0_6, %c0_7] : memref<128x128xf32, #tpu.memory_space<vmem>>, vector<128x128xf32>
    %c0_8 = arith.constant 0 : index
    %c0_9 = arith.constant 0 : index
    %9 = vector.load %arg5[%c0_8, %c0_9] : memref<1x128xf32, #tpu.memory_space<vmem>>, vector<1x128xf32>
    %cst_10 = arith.constant dense<0.000000e+00> : vector<256x128xf32>
    %10 = tpu.matmul %7, %8, %cst_10 {dimension_numbers = #tpu.dot_dimension_numbers<[1], [0], [0], [1], [0, 0, 1, 1], [], []>} : vector<256x128xf32>, vector<128x128xf32>, vector<256x128xf32> -> vector<256x128xf32>
    %11 = vector.broadcast %9 : vector<1x128xf32> to vector<256x128xf32>
    %12 = arith.addf %10, %11 : vector<256x128xf32>
    %cst_11 = arith.constant 0.000000e+00 : f32
    %13 = vector.broadcast %cst_11 : f32 to vector<256x128xf32>
    %14 = arith.maximumf %12, %13 : vector<256x128xf32>
    %c0_12 = arith.constant 0 : index
    %c0_13 = arith.constant 0 : index
    %15 = vector.load %arg6[%c0_12, %c0_13] : memref<128x128xf32, #tpu.memory_space<vmem>>, vector<128x128xf32>
    %c0_14 = arith.constant 0 : index
    %c0_15 = arith.constant 0 : index
    %16 = vector.load %arg7[%c0_14, %c0_15] : memref<1x128xf32, #tpu.memory_space<vmem>>, vector<1x128xf32>
    %cst_16 = arith.constant dense<0.000000e+00> : vector<256x128xf32>
    %17 = tpu.matmul %14, %15, %cst_16 {dimension_numbers = #tpu.dot_dimension_numbers<[1], [0], [0], [1], [0, 0, 1, 1], [], []>} : vector<256x128xf32>, vector<128x128xf32>, vector<256x128xf32> -> vector<256x128xf32>
    %18 = vector.broadcast %16 : vector<1x128xf32> to vector<256x128xf32>
    %19 = arith.addf %17, %18 : vector<256x128xf32>
    %c0_17 = arith.constant 0 : index
    %c0_18 = arith.constant 0 : index
    %20 = vector.load %arg8[%c0_17, %c0_18] : memref<256x128xf32, #tpu.memory_space<vmem>>, vector<256x128xf32>
    tpu.vector_store %arg8[%c0_17, %c0_18], %19 {strides = array<i32>} : memref<256x128xf32, #tpu.memory_space<vmem>>, vector<256x128xf32>,
    return
  }
  func.func @transform_0(%arg0: i32) -> (i32, i32) {
    %c0_i32 = arith.constant 0 : i32
    %c0_i32_0 = arith.constant 0 : i32
    return %arg0, %c0_i32 : i32, i32
  }
  func.func @transform_1(%arg0: i32) -> (i32, i32) {
    %c0_i32 = arith.constant 0 : i32
    %c0_i32_0 = arith.constant 0 : i32
    %c0_i32_1 = arith.constant 0 : i32
    return %c0_i32, %c0_i32_0 : i32, i32
  }
  func.func @transform_2(%arg0: i32) -> (i32, i32) {
    %c0_i32 = arith.constant 0 : i32
    %c0_i32_0 = arith.constant 0 : i32
    %c0_i32_1 = arith.constant 0 : i32
    return %c0_i32, %c0_i32_0 : i32, i32
  }
  func.func @transform_3(%arg0: i32) -> (i32, i32) {
    %c0_i32 = arith.constant 0 : i32
    %c0_i32_0 = arith.constant 0 : i32
    %c0_i32_1 = arith.constant 0 : i32
    return %c0_i32, %c0_i32_0 : i32, i32
  }
  func.func @transform_4(%arg0: i32) -> (i32, i32) {
    %c0_i32 = arith.constant 0 : i32
    %c0_i32_0 = arith.constant 0 : i32
    %c0_i32_1 = arith.constant 0 : i32
    return %c0_i32, %c0_i32_0 : i32, i32
  }
  func.func @transform_5(%arg0: i32) -> (i32, i32) {
    %c0_i32 = arith.constant 0 : i32
    %c0_i32_0 = arith.constant 0 : i32
    %c0_i32_1 = arith.constant 0 : i32
    return %c0_i32, %c0_i32_0 : i32, i32
  }
  func.func @transform_6(%arg0: i32) -> (i32, i32) {
    %c0_i32 = arith.constant 0 : i32
    %c0_i32_0 = arith.constant 0 : i32
    %c0_i32_1 = arith.constant 0 : i32
    return %c0_i32, %c0_i32_0 : i32, i32
  }
  func.func @transform_7(%arg0: i32) -> (i32, i32) {
    %c0_i32 = arith.constant 0 : i32
    %c0_i32_0 = arith.constant 0 : i32
    return %arg0, %c0_i32 : i32, i32
  }
}

</mosaic_0001>

<llo_original>
// kernel: tpu_custom_call.1
$region0: #{tpu_custom_call.1}
  #allocation0 [shape = 'u32[]', space=smem, size = 0x4, offset = 0x4, fixed_abs, tag = 'smem constant byte address 0x4 - core index']
  #allocation1 [shape = 'u32[144,128]{1,0:T(1,128)}', space=vmem, size = 0x12000, scoped, tag = 'internal scratch']
  %s0 = inlined_call_operand.vmem [shape: f32[256,16], index: 0, kind: input, shape index: {}]
  %s1 = inlined_call_operand.vmem [shape: f32[16,128], index: 1, kind: input, shape index: {}]
  %s2 = inlined_call_operand.vmem [shape: f32[1,128], index: 2, kind: input, shape index: {}]
  %s3 = inlined_call_operand.vmem [shape: f32[128,128], index: 3, kind: input, shape index: {}]
  %s4 = inlined_call_operand.vmem [shape: f32[1,128], index: 4, kind: input, shape index: {}]
  %s5 = inlined_call_operand.vmem [shape: f32[128,128], index: 5, kind: input, shape index: {}]
  %s6 = inlined_call_operand.vmem [shape: f32[1,128], index: 6, kind: input, shape index: {}]
  %s7 = inlined_call_operand.hbm [shape: f32[256,128], index: 7, kind: output, shape index: {}]
  %s8 = sld [smem:[#allocation0]]
  $region38: #{tpu_custom_call.1} parent=0
    _
  %s10 = ssub.s32 1, %s8
  %s11 = scalar_select 0, %s10, %s8
  $region1: #{tpu_custom_call.1} parent=0
    #allocation2 [shape = 'u8[131072]{0}', space=vmem, size = 0x20000, scoped, tag = 'output window, operand 0, single buffered']
    #allocation3 [shape = 's32[1]{0}', space=sflag, size = 0x4, scoped, tag = 'scoped memory for tpu_custom_call.1']
    %12 = vsyncpa [#allocation3], 0
    // Predicated region
    $region2: #{tpu_custom_call.1} parent=1 // pred_check
      _
    $region3: #{tpu_custom_call.1} parent=1 // pred_check_branch
      %14 = sbr.rel (0) target = $region5
    $region4: #{tpu_custom_call.1} parent=1 // pred_region
      _
    $region5: #{tpu_custom_call.1} parent=1 // pred_fallthru
      _
    // Predicated region
    $region6: #{tpu_custom_call.1} parent=1 // pred_check
      _
    $region7: #{tpu_custom_call.1} parent=1 // pred_check_branch
      %16 = sbr.rel (0) target = $region9
    $region8: #{tpu_custom_call.1} parent=1 // pred_region
      _
    $region9: #{tpu_custom_call.1} parent=1 // pred_fallthru
      _
    // Predicated region
    $region10: #{tpu_custom_call.1} parent=1 // pred_check
      _
    $region11: #{tpu_custom_call.1} parent=1 // pred_check_branch
      %18 = sbr.rel (0) target = $region13
    $region12: #{tpu_custom_call.1} parent=1 // pred_region
      _
    $region13: #{tpu_custom_call.1} parent=1 // pred_fallthru
      _
    // Predicated region
    $region14: #{tpu_custom_call.1} parent=1 // pred_check
      _
    $region15: #{tpu_custom_call.1} parent=1 // pred_check_branch
      %20 = sbr.rel (0) target = $region17
    $region16: #{tpu_custom_call.1} parent=1 // pred_region
      _
    $region17: #{tpu_custom_call.1} parent=1 // pred_fallthru
      _
    // Predicated region
    $region18: #{tpu_custom_call.1} parent=1 // pred_check
      _
    $region19: #{tpu_custom_call.1} parent=1 // pred_check_branch
      %22 = sbr.rel (0) target = $region21
    $region20: #{tpu_custom_call.1} parent=1 // pred_region
      _
    $region21: #{tpu_custom_call.1} parent=1 // pred_fallthru
      _
    // Predicated region
    $region22: #{tpu_custom_call.1} parent=1 // pred_check
      _
    $region23: #{tpu_custom_call.1} parent=1 // pred_check_branch
      %24 = sbr.rel (0) target = $region25
    $region24: #{tpu_custom_call.1} parent=1 // pred_region
      _
    $region25: #{tpu_custom_call.1} parent=1 // pred_fallthru
      _
    // Predicated region
    $region26: #{tpu_custom_call.1} parent=1 // pred_check
      _
    $region27: #{tpu_custom_call.1} parent=1 // pred_check_branch
      %26 = sbr.rel (0) target = $region29
    $region28: #{tpu_custom_call.1} parent=1 // pred_region
      _
    $region29: #{tpu_custom_call.1} parent=1 // pred_fallthru
      _
    %v27 = vld [vmem:[%s0] sm:$0xff]
    %v28 = vld [vmem:[%s0 + $0x8] sm:$0xff]
    %v29 = vld [vmem:[%s0 + $0x10] sm:$0xff]
    %v30 = vld [vmem:[%s0 + $0x18] sm:$0xff]
    %v31 = vld [vmem:[%s0 + $0x20] sm:$0xff]
    %v32 = vld [vmem:[%s0 + $0x28] sm:$0xff]
    %v33 = vld [vmem:[%s0 + $0x30] sm:$0xff]
    %v34 = vld [vmem:[%s0 + $0x38] sm:$0xff]
    %v35 = vld [vmem:[%s0 + $0x40] sm:$0xff]
    %v36 = vld [vmem:[%s0 + $0x48] sm:$0xff]
    %v37 = vld [vmem:[%s0 + $0x50] sm:$0xff]
    %v38 = vld [vmem:[%s0 + $0x58] sm:$0xff]
    %v39 = vld [vmem:[%s0 + $0x60] sm:$0xff]
    %v40 = vld [vmem:[%s0 + $0x68] sm:$0xff]
    %v41 = vld [vmem:[%s0 + $0x70] sm:$0xff]
    %v42 = vld [vmem:[%s0 + $0x78] sm:$0xff]
    %v43 = vld [vmem:[%s0 + $0x80] sm:$0xff]
    %v44 = vld [vmem:[%s0 + $0x88] sm:$0xff]
    %v45 = vld [vmem:[%s0 + $0x90] sm:$0xff]
    %v46 = vld [vmem:[%s0 + $0x98] sm:$0xff]
    %v47 = vld [vmem:[%s0 + $0xa0] sm:$0xff]
    %v48 = vld [vmem:[%s0 + $0xa8] sm:$0xff]
    %v49 = vld [vmem:[%s0 + $0xb0] sm:$0xff]
    %v50 = vld [vmem:[%s0 + $0xb8] sm:$0xff]
    %v51 = vld [vmem:[%s0 + $0xc0] sm:$0xff]
    %v52 = vld [vmem:[%s0 + $0xc8] sm:$0xff]
    %v53 = vld [vmem:[%s0 + $0xd0] sm:$0xff]
    %v54 = vld [vmem:[%s0 + $0xd8] sm:$0xff]
    %v55 = vld [vmem:[%s0 + $0xe0] sm:$0xff]
    %v56 = vld [vmem:[%s0 + $0xe8] sm:$0xff]
    %v57 = vld [vmem:[%s0 + $0xf0] sm:$0xff]
    %v58 = vld [vmem:[%s0 + $0xf8] sm:$0xff]
    %v59 = vld [vmem:[%s1] sm:$0xff]
    %v60 = vld [vmem:[%s1 + $0x8] sm:$0xff]
    %v61 = vld [vmem:[%s2] sm:$0x1]
    %v63 = vlaneseq
    %v64 = vshrl.u32 %v63, 7
    %v65 = vsub.s32 0, %v64
    %v66 = vrot.slane %v61, %v65
    %vm68 = vcmask 130048
    %v70 = vsel %vm68, %v27, 0
    %v73 = vsel %vm68, %v28, 0
    %v76 = vsel %vm68, %v29, 0
    %v79 = vsel %vm68, %v30, 0
    %v82 = vsel %vm68, %v31, 0
    %v85 = vsel %vm68, %v32, 0
    %v88 = vsel %vm68, %v33, 0
    %v91 = vsel %vm68, %v34, 0
    %v94 = vsel %vm68, %v35, 0
    %v97 = vsel %vm68, %v36, 0
    %v100 = vsel %vm68, %v37, 0
    %v103 = vsel %vm68, %v38, 0
    %v106 = vsel %vm68, %v39, 0
    %v109 = vsel %vm68, %v40, 0
    %v112 = vsel %vm68, %v41, 0
    %v115 = vsel %vm68, %v42, 0
    %v118 = vsel %vm68, %v43, 0
    %v121 = vsel %vm68, %v44, 0
    %v124 = vsel %vm68, %v45, 0
    %v127 = vsel %vm68, %v46, 0
    %v130 = vsel %vm68, %v47, 0
    %v133 = vsel %vm68, %v48, 0
    %v136 = vsel %vm68, %v49, 0
    %v139 = vsel %vm68, %v50, 0
    %v142 = vsel %vm68, %v51, 0
    %v145 = vsel %vm68, %v52, 0
    %v148 = vsel %vm68, %v53, 0
    %v151 = vsel %vm68, %v54, 0
    %v154 = vsel %vm68, %v55, 0
    %v157 = vsel %vm68, %v56, 0
    %v160 = vsel %vm68, %v57, 0
    %v163 = vsel %vm68, %v58, 0
    %165 = vmatprep.subr.mxu0 0.0
    %166 = vmatpush1.msra.mxu0 %v59
    %167 = vmatprep.subr.mxu0 0.0
    %168 = vmatpush1.msra.mxu0 %v60
    %169 = vmatprep.subr.mxu0 0.0
    %170 = vmatpush1.msra.mxu0 0.0
    %171 = vmatprep.subr.mxu0 0.0
    %172 = vmatpush1.msra.mxu0 0.0
    %173 = vmatprep.subr.mxu0 0.0
    %174 = vmatpush1.msra.mxu0 0.0
    %175 = vmatprep.subr.mxu0 0.0
    %176 = vmatpush1.msra.mxu0 0.0
    %177 = vmatprep.subr.mxu0 0.0
    %178 = vmatpush1.msra.mxu0 0.0
    %179 = vmatprep.subr.mxu0 0.0
    %180 = vmatpush1.msra.mxu0 0.0
    %181 = vmatprep.subr.mxu0 0.0
    %182 = vmatpush1.msra.mxu0 0.0
    %183 = vmatprep.subr.mxu0 0.0
    %184 = vmatpush1.msra.mxu0 0.0
    %185 = vmatprep.subr.mxu0 0.0
    %186 = vmatpush1.msra.mxu0 0.0
    %187 = vmatprep.subr.mxu0 0.0
    %188 = vmatpush1.msra.mxu0 0.0
    %189 = vmatprep.subr.mxu0 0.0
    %190 = vmatpush1.msra.mxu0 0.0
    %191 = vmatprep.subr.mxu0 0.0
    %192 = vmatpush1.msra.mxu0 0.0
    %193 = vmatprep.subr.mxu0 0.0
    %194 = vmatpush1.msra.mxu0 0.0
    %195 = vmatprep.subr.mxu0 0.0
    %196 = vmatpush1.msra.mxu0 0.0
    %197 = vmatprep.subr.mxu0 0.0
    %198 = vmatpush1.msra.mxu0 0.0
    %199 = vmatprep.subr.mxu0 0.0
    %200 = vmatpush1.msra.mxu0 0.0
    %201 = vmatprep.subr.mxu0 0.0
    %202 = vmatpush1.msra.mxu0 0.0
    %203 = vmatprep.subr.mxu0 0.0
    %204 = vmatpush1.msra.mxu0 0.0
    %205 = vmatprep.subr.mxu0 0.0
    %206 = vmatpush1.msra.mxu0 0.0
    %207 = vmatprep.subr.mxu0 0.0
    %208 = vmatpush1.msra.mxu0 0.0
    %209 = vmatprep.subr.mxu0 0.0
    %210 = vmatpush1.msra.mxu0 0.0
    %211 = vmatprep.subr.mxu0 0.0
    %212 = vmatpush1.msra.mxu0 0.0
    %213 = vmatprep.subr.mxu0 0.0
    %214 = vmatpush1.msra.mxu0 0.0
    %215 = vmatprep.subr.mxu0 0.0
    %216 = vmatpush1.msra.mxu0 0.0
    %217 = vmatprep.subr.mxu0 0.0
    %218 = vmatpush1.msra.mxu0 0.0
    %219 = vmatprep.subr.mxu0 0.0
    %220 = vmatpush1.msra.mxu0 0.0
    %221 = vmatprep.subr.mxu0 0.0
    %222 = vmatpush1.msra.mxu0 0.0
    %223 = vmatprep.subr.mxu0 0.0
    %224 = vmatpush1.msra.mxu0 0.0
    %225 = vmatprep.subr.mxu0 0.0
    %226 = vmatpush1.msra.mxu0 0.0
    %227 = vmatprep.subr.mxu0 0.0
    %228 = vmatpush1.msra.mxu0 0.0
    %229 = vmatprep.mubr.f32.mxu0 0.0
    %230 = vmatmul.mubr.f32.gmra.mrb[0].mxu0 %v70
    %v231 = vpop.f32.mrb[0].mxu0
    %v232 = vadd.f32 %v66, %v231
    %v233 = vpop.f32.mrb[0].mxu0
    %234 = vmatprep.mubr.f32.mxu0 0.0
    %235 = vmatmul.mubr.f32.gmra.mrb[0].mxu0 %v73
    %v236 = vpop.f32.mrb[0].mxu0
    %v237 = vadd.f32 %v66, %v236
    %v238 = vpop.f32.mrb[0].mxu0
    %239 = vmatprep.mubr.f32.mxu0 0.0
    %240 = vmatmul.mubr.f32.gmra.mrb[0].mxu0 %v76
    %v241 = vpop.f32.mrb[0].mxu0
    %v242 = vadd.f32 %v66, %v241
    %v243 = vpop.f32.mrb[0].mxu0
    %244 = vmatprep.mubr.f32.mxu0 0.0
    %245 = vmatmul.mubr.f32.gmra.mrb[0].mxu0 %v79
    %v246 = vpop.f32.mrb[0].mxu0
    %v247 = vadd.f32 %v66, %v246
    %v248 = vpop.f32.mrb[0].mxu0
    %249 = vmatprep.mubr.f32.mxu0 0.0
    %250 = vmatmul.mubr.f32.gmra.mrb[0].mxu0 %v82
    %v251 = vpop.f32.mrb[0].mxu0
    %v252 = vadd.f32 %v66, %v251
    %v253 = vpop.f32.mrb[0].mxu0
    %254 = vmatprep.mubr.f32.mxu0 0.0
    %255 = vmatmul.mubr.f32.gmra.mrb[0].mxu0 %v85
    %v256 = vpop.f32.mrb[0].mxu0
    %v257 = vadd.f32 %v66, %v256
    %v258 = vpop.f32.mrb[0].mxu0
    %259 = vmatprep.mubr.f32.mxu0 0.0
    %260 = vmatmul.mubr.f32.gmra.mrb[0].mxu0 %v88
    %v261 = vpop.f32.mrb[0].mxu0
    %v262 = vadd.f32 %v66, %v261
    %v263 = vpop.f32.mrb[0].mxu0
    %264 = vmatprep.mubr.f32.mxu0 0.0
    %265 = vmatmul.mubr.f32.gmra.mrb[0].mxu0 %v91
    %v266 = vpop.f32.mrb[0].mxu0
    %v267 = vadd.f32 %v66, %v266
    %v268 = vpop.f32.mrb[0].mxu0
    %269 = vmatprep.mubr.f32.mxu0 0.0
    %270 = vmatmul.mubr.f32.gmra.mrb[0].mxu0 %v94
    %v271 = vpop.f32.mrb[0].mxu0
    %v272 = vadd.f32 %v66, %v271
    %v273 = vpop.f32.mrb[0].mxu0
    %274 = vmatprep.mubr.f32.mxu0 0.0
    %275 = vmatmul.mubr.f32.gmra.mrb[0].mxu0 %v97
    %v276 = vpop.f32.mrb[0].mxu0
    %v277 = vadd.f32 %v66, %v276
    %v278 = vpop.f32.mrb[0].mxu0
    %279 = vmatprep.mubr.f32.mxu0 0.0
    %280 = vmatmul.mubr.f32.gmra.mrb[0].mxu0 %v100
    %v281 = vpop.f32.mrb[0].mxu0
    %v282 = vadd.f32 %v66, %v281
    %v283 = vpop.f32.mrb[0].mxu0
    %284 = vmatprep.mubr.f32.mxu0 0.0
    %285 = vmatmul.mubr.f32.gmra.mrb[0].mxu0 %v103
    %v286 = vpop.f32.mrb[0].mxu0
    %v287 = vadd.f32 %v66, %v286
    %v288 = vpop.f32.mrb[0].mxu0
    %289 = vmatprep.mubr.f32.mxu0 0.0
    %290 = vmatmul.mubr.f32.gmra.mrb[0].mxu0 %v106
    %v291 = vpop.f32.mrb[0].mxu0
    %v292 = vadd.f32 %v66, %v291
    %v293 = vpop.f32.mrb[0].mxu0
    %294 = vmatprep.mubr.f32.mxu0 0.0
    %295 = vmatmul.mubr.f32.gmra.mrb[0].mxu0 %v109
    %v296 = vpop.f32.mrb[0].mxu0
    %v297 = vadd.f32 %v66, %v296
    %v298 = vpop.f32.mrb[0].mxu0
    %299 = vmatprep.mubr.f32.mxu0 0.0
    %300 = vmatmul.mubr.f32.gmra.mrb[0].mxu0 %v112
    %v301 = vpop.f32.mrb[0].mxu0
    %v302 = vadd.f32 %v66, %v301
    %v303 = vpop.f32.mrb[0].mxu0
    %304 = vmatprep.mubr.f32.mxu0 0.0
    %305 = vmatmul.mubr.f32.gmra.mrb[0].mxu0 %v115
    %v306 = vpop.f32.mrb[0].mxu0
    %v307 = vadd.f32 %v66, %v306
    %v308 = vpop.f32.mrb[0].mxu0
    %309 = vmatprep.mubr.f32.mxu0 0.0
    %310 = vmatmul.mubr.f32.gmra.mrb[0].mxu0 %v118
    %v311 = vpop.f32.mrb[0].mxu0
    %v312 = vadd.f32 %v66, %v311
    %v313 = vpop.f32.mrb[0].mxu0
    %314 = vmatprep.mubr.f32.mxu0 0.0
    %315 = vmatmul.mubr.f32.gmra.mrb[0].mxu0 %v121
    %v316 = vpop.f32.mrb[0].mxu0
    %v317 = vadd.f32 %v66, %v316
    %v318 = vpop.f32.mrb[0].mxu0
    %319 = vmatprep.mubr.f32.mxu0 0.0
    %320 = vmatmul.mubr.f32.gmra.mrb[0].mxu0 %v124
    %v321 = vpop.f32.mrb[0].mxu0
    %v322 = vadd.f32 %v66, %v321
    %v323 = vpop.f32.mrb[0].mxu0
    %324 = vmatprep.mubr.f32.mxu0 0.0
    %325 = vmatmul.mubr.f32.gmra.mrb[0].mxu0 %v127
    %v326 = vpop.f32.mrb[0].mxu0
    %v327 = vadd.f32 %v66, %v326
    %v328 = vpop.f32.mrb[0].mxu0
    %329 = vmatprep.mubr.f32.mxu0 0.0
    %330 = vmatmul.mubr.f32.gmra.mrb[0].mxu0 %v130
    %v331 = vpop.f32.mrb[0].mxu0
    %v332 = vadd.f32 %v66, %v331
    %v333 = vpop.f32.mrb[0].mxu0
    %334 = vmatprep.mubr.f32.mxu0 0.0
    %335 = vmatmul.mubr.f32.gmra.mrb[0].mxu0 %v133
    %v336 = vpop.f32.mrb[0].mxu0
    %v337 = vadd.f32 %v66, %v336
    %v338 = vpop.f32.mrb[0].mxu0
    %339 = vmatprep.mubr.f32.mxu0 0.0
    %340 = vmatmul.mubr.f32.gmra.mrb[0].mxu0 %v136
    %v341 = vpop.f32.mrb[0].mxu0
    %v342 = vadd.f32 %v66, %v341
    %v343 = vpop.f32.mrb[0].mxu0
    %344 = vmatprep.mubr.f32.mxu0 0.0
    %345 = vmatmul.mubr.f32.gmra.mrb[0].mxu0 %v139
    %v346 = vpop.f32.mrb[0].mxu0
    %v347 = vadd.f32 %v66, %v346
    %v348 = vpop.f32.mrb[0].mxu0
    %349 = vmatprep.mubr.f32.mxu0 0.0
    %350 = vmatmul.mubr.f32.gmra.mrb[0].mxu0 %v142
    %v351 = vpop.f32.mrb[0].mxu0
    %v352 = vadd.f32 %v66, %v351
    %v353 = vpop.f32.mrb[0].mxu0
    %354 = vmatprep.mubr.f32.mxu0 0.0
    %355 = vmatmul.mubr.f32.gmra.mrb[0].mxu0 %v145
    %v356 = vpop.f32.mrb[0].mxu0
    %v357 = vadd.f32 %v66, %v356
    %v358 = vpop.f32.mrb[0].mxu0
    %359 = vmatprep.mubr.f32.mxu0 0.0
    %360 = vmatmul.mubr.f32.gmra.mrb[0].mxu0 %v148
    %v361 = vpop.f32.mrb[0].mxu0
    %v362 = vadd.f32 %v66, %v361
    %v363 = vpop.f32.mrb[0].mxu0
    %364 = vmatprep.mubr.f32.mxu0 0.0
    %365 = vmatmul.mubr.f32.gmra.mrb[0].mxu0 %v151
    %v366 = vpop.f32.mrb[0].mxu0
    %v367 = vadd.f32 %v66, %v366
    %v368 = vpop.f32.mrb[0].mxu0
    %369 = vmatprep.mubr.f32.mxu0 0.0
    %370 = vmatmul.mubr.f32.gmra.mrb[0].mxu0 %v154
    %v371 = vpop.f32.mrb[0].mxu0
    %v372 = vadd.f32 %v66, %v371
    %v373 = vpop.f32.mrb[0].mxu0
    %374 = vmatprep.mubr.f32.mxu0 0.0
    %375 = vmatmul.mubr.f32.gmra.mrb[0].mxu0 %v157
    %v376 = vpop.f32.mrb[0].mxu0
    %v377 = vadd.f32 %v66, %v376
    %v378 = vpop.f32.mrb[0].mxu0
    %379 = vmatprep.mubr.f32.mxu0 0.0
    %380 = vmatmul.mubr.f32.gmra.mrb[0].mxu0 %v160
    %v381 = vpop.f32.mrb[0].mxu0
    %v382 = vadd.f32 %v66, %v381
    %v383 = vpop.f32.mrb[0].mxu0
    %384 = vmatprep.mubr.f32.mxu0 0.0
    %385 = vmatmul.mubr.f32.gmra.mrb[0].mxu0 %v163
    %v386 = vpop.f32.mrb[0].mxu0
    %v387 = vadd.f32 %v66, %v386
    %v388 = vpop.f32.mrb[0].mxu0
    %389 = vdwg.mxu0
    %v390 = vmax.f32 %v232, 0.0
    %v391 = vmax.f32 %v237, 0.0
    %v392 = vmax.f32 %v242, 0.0
    %v393 = vmax.f32 %v247, 0.0
    %v394 = vmax.f32 %v252, 0.0
    %v395 = vmax.f32 %v257, 0.0
    %v396 = vmax.f32 %v262, 0.0
    %v397 = vmax.f32 %v267, 0.0
    %v398 = vmax.f32 %v272, 0.0
    %v399 = vmax.f32 %v277, 0.0
    %v400 = vmax.f32 %v282, 0.0
    %v401 = vmax.f32 %v287, 0.0
    %v402 = vmax.f32 %v292, 0.0
    %v403 = vmax.f32 %v297, 0.0
    %v404 = vmax.f32 %v302, 0.0
    %v405 = vmax.f32 %v307, 0.0
    %v406 = vmax.f32 %v312, 0.0
    %v407 = vmax.f32 %v317, 0.0
    %v408 = vmax.f32 %v322, 0.0
    %v409 = vmax.f32 %v327, 0.0
    %v410 = vmax.f32 %v332, 0.0
    %v411 = vmax.f32 %v337, 0.0
    %v412 = vmax.f32 %v342, 0.0
    %v413 = vmax.f32 %v347, 0.0
    %v414 = vmax.f32 %v352, 0.0
    %v415 = vmax.f32 %v357, 0.0
    %v416 = vmax.f32 %v362, 0.0
    %v417 = vmax.f32 %v367, 0.0
    %v418 = vmax.f32 %v372, 0.0
    %v419 = vmax.f32 %v377, 0.0
    %v420 = vmax.f32 %v382, 0.0
    %v421 = vmax.f32 %v387, 0.0
    %v422 = vld [vmem:[%s3] sm:$0xff]
    %v423 = vld [vmem:[%s3 + $0x8] sm:$0xff]
    %v424 = vld [vmem:[%s3 + $0x10] sm:$0xff]
    %v425 = vld [vmem:[%s3 + $0x18] sm:$0xff]
    %v426 = vld [vmem:[%s3 + $0x20] sm:$0xff]
    %v427 = vld [vmem:[%s3 + $0x28] sm:$0xff]
    %v428 = vld [vmem:[%s3 + $0x30] sm:$0xff]
    %v429 = vld [vmem:[%s3 + $0x38] sm:$0xff]
    %v430 = vld [vmem:[%s3 + $0x40] sm:$0xff]
    %v431 = vld [vmem:[%s3 + $0x48] sm:$0xff]
    %v432 = vld [vmem:[%s3 + $0x50] sm:$0xff]
    %v433 = vld [vmem:[%s3 + $0x58] sm:$0xff]
    %v434 = vld [vmem:[%s3 + $0x60] sm:$0xff]
    %v435 = vld [vmem:[%s3 + $0x68] sm:$0xff]
    %v436 = vld [vmem:[%s3 + $0x70] sm:$0xff]
    %v437 = vld [vmem:[%s3 + $0x78] sm:$0xff]
    %v438 = vld [vmem:[%s4] sm:$0x1]
    %v440 = vlaneseq
    %v441 = vshrl.u32 %v440, 7
    %v442 = vsub.s32 0, %v441
    %v443 = vrot.slane %v438, %v442
    %445 = vmatprep.subr.mxu0 0.0
    %446 = vmatpush1.msra.mxu0 %v422
    %447 = vmatprep.subr.mxu0 0.0
    %448 = vmatpush1.msra.mxu0 %v423
    %449 = vmatprep.subr.mxu0 0.0
    %450 = vmatpush1.msra.mxu0 %v424
    %451 = vmatprep.subr.mxu0 0.0
    %452 = vmatpush1.msra.mxu0 %v425
    %453 = vmatprep.subr.mxu0 0.0
    %454 = vmatpush1.msra.mxu0 %v426
    %455 = vmatprep.subr.mxu0 0.0
    %456 = vmatpush1.msra.mxu0 %v427
    %457 = vmatprep.subr.mxu0 0.0
    %458 = vmatpush1.msra.mxu0 %v428
    %459 = vmatprep.subr.mxu0 0.0
    %460 = vmatpush1.msra.mxu0 %v429
    %461 = vmatprep.subr.mxu0 0.0
    %462 = vmatpush1.msra.mxu0 %v430
    %463 = vmatprep.subr.mxu0 0.0
    %464 = vmatpush1.msra.mxu0 %v431
    %465 = vmatprep.subr.mxu0 0.0
    %466 = vmatpush1.msra.mxu0 %v432
    %467 = vmatprep.subr.mxu0 0.0
    %468 = vmatpush1.msra.mxu0 %v433
    %469 = vmatprep.subr.mxu0 0.0
    %470 = vmatpush1.msra.mxu0 %v434
    %471 = vmatprep.subr.mxu0 0.0
    %472 = vmatpush1.msra.mxu0 %v435
    %473 = vmatprep.subr.mxu0 0.0
    %474 = vmatpush1.msra.mxu0 %v436
    %475 = vmatprep.subr.mxu0 0.0
    %476 = vmatpush1.msra.mxu0 %v437
    %477 = vmatprep.subr.mxu0 0.0
    %478 = vmatpush1.msra.mxu0 0.0
    %479 = vmatprep.subr.mxu0 0.0
    %480 = vmatpush1.msra.mxu0 0.0
    %481 = vmatprep.subr.mxu0 0.0
    %482 = vmatpush1.msra.mxu0 0.0
    %483 = vmatprep.subr.mxu0 0.0
    %484 = vmatpush1.msra.mxu0 0.0
    %485 = vmatprep.subr.mxu0 0.0
    %486 = vmatpush1.msra.mxu0 0.0
    %487 = vmatprep.subr.mxu0 0.0
    %488 = vmatpush1.msra.mxu0 0.0
    %489 = vmatprep.subr.mxu0 0.0
    %490 = vmatpush1.msra.mxu0 0.0
    %491 = vmatprep.subr.mxu0 0.0
    %492 = vmatpush1.msra.mxu0 0.0
    %493 = vmatprep.subr.mxu0 0.0
    %494 = vmatpush1.msra.mxu0 0.0
    %495 = vmatprep.subr.mxu0 0.0
    %496 = vmatpush1.msra.mxu0 0.0
    %497 = vmatprep.subr.mxu0 0.0
    %498 = vmatpush1.msra.mxu0 0.0
    %499 = vmatprep.subr.mxu0 0.0
    %500 = vmatpush1.msra.mxu0 0.0
    %501 = vmatprep.subr.mxu0 0.0
    %502 = vmatpush1.msra.mxu0 0.0
    %503 = vmatprep.subr.mxu0 0.0
    %504 = vmatpush1.msra.mxu0 0.0
    %505 = vmatprep.subr.mxu0 0.0
    %506 = vmatpush1.msra.mxu0 0.0
    %507 = vmatprep.subr.mxu0 0.0
    %508 = vmatpush1.msra.mxu0 0.0
    %509 = vmatprep.mubr.f32.mxu0 0.0
    %510 = vmatmul.mubr.f32.gmra.mrb[0].mxu0 %v390
    %v511 = vpop.f32.mrb[0].mxu0
    %v512 = vadd.f32 %v443, %v511
    %v513 = vpop.f32.mrb[0].mxu0
    %514 = vmatprep.mubr.f32.mxu0 0.0
    %515 = vmatmul.mubr.f32.gmra.mrb[0].mxu0 %v391
    %v516 = vpop.f32.mrb[0].mxu0
    %v517 = vadd.f32 %v443, %v516
    %v518 = vpop.f32.mrb[0].mxu0
    %519 = vmatprep.mubr.f32.mxu0 0.0
    %520 = vmatmul.mubr.f32.gmra.mrb[0].mxu0 %v392
    %v521 = vpop.f32.mrb[0].mxu0
    %v522 = vadd.f32 %v443, %v521
    %v523 = vpop.f32.mrb[0].mxu0
    %524 = vmatprep.mubr.f32.mxu0 0.0
    %525 = vmatmul.mubr.f32.gmra.mrb[0].mxu0 %v393
    %v526 = vpop.f32.mrb[0].mxu0
    %v527 = vadd.f32 %v443, %v526
    %v528 = vpop.f32.mrb[0].mxu0
    %529 = vmatprep.mubr.f32.mxu0 0.0
    %530 = vmatmul.mubr.f32.gmra.mrb[0].mxu0 %v394
    %v531 = vpop.f32.mrb[0].mxu0
    %v532 = vadd.f32 %v443, %v531
    %v533 = vpop.f32.mrb[0].mxu0
    %534 = vmatprep.mubr.f32.mxu0 0.0
    %535 = vmatmul.mubr.f32.gmra.mrb[0].mxu0 %v395
    %v536 = vpop.f32.mrb[0].mxu0
    %v537 = vadd.f32 %v443, %v536
    %v538 = vpop.f32.mrb[0].mxu0
    %539 = vmatprep.mubr.f32.mxu0 0.0
    %540 = vmatmul.mubr.f32.gmra.mrb[0].mxu0 %v396
    %v541 = vpop.f32.mrb[0].mxu0
    %v542 = vadd.f32 %v443, %v541
    %v543 = vpop.f32.mrb[0].mxu0
    %544 = vmatprep.mubr.f32.mxu0 0.0
    %545 = vmatmul.mubr.f32.gmra.mrb[0].mxu0 %v397
    %v546 = vpop.f32.mrb[0].mxu0
    %v547 = vadd.f32 %v443, %v546
    %v548 = vpop.f32.mrb[0].mxu0
    %549 = vmatprep.mubr.f32.mxu0 0.0
    %550 = vmatmul.mubr.f32.gmra.mrb[0].mxu0 %v398
    %v551 = vpop.f32.mrb[0].mxu0
    %v552 = vadd.f32 %v443, %v551
    %v553 = vpop.f32.mrb[0].mxu0
    %554 = vmatprep.mubr.f32.mxu0 0.0
    %555 = vmatmul.mubr.f32.gmra.mrb[0].mxu0 %v399
    %v556 = vpop.f32.mrb[0].mxu0
    %v557 = vadd.f32 %v443, %v556
    %v558 = vpop.f32.mrb[0].mxu0
    %559 = vmatprep.mubr.f32.mxu0 0.0
    %560 = vmatmul.mubr.f32.gmra.mrb[0].mxu0 %v400
    %v561 = vpop.f32.mrb[0].mxu0
    %v562 = vadd.f32 %v443, %v561
    %v563 = vpop.f32.mrb[0].mxu0
    %564 = vmatprep.mubr.f32.mxu0 0.0
    %565 = vmatmul.mubr.f32.gmra.mrb[0].mxu0 %v401
    %v566 = vpop.f32.mrb[0].mxu0
    %v567 = vadd.f32 %v443, %v566
    %v568 = vpop.f32.mrb[0].mxu0
    %569 = vmatprep.mubr.f32.mxu0 0.0
    %570 = vmatmul.mubr.f32.gmra.mrb[0].mxu0 %v402
    %v571 = vpop.f32.mrb[0].mxu0
    %v572 = vadd.f32 %v443, %v571
    %v573 = vpop.f32.mrb[0].mxu0
    %574 = vmatprep.mubr.f32.mxu0 0.0
    %575 = vmatmul.mubr.f32.gmra.mrb[0].mxu0 %v403
    %v576 = vpop.f32.mrb[0].mxu0
    %v577 = vadd.f32 %v443, %v576
    %v578 = vpop.f32.mrb[0].mxu0
    %579 = vmatprep.mubr.f32.mxu0 0.0
    %580 = vmatmul.mubr.f32.gmra.mrb[0].mxu0 %v404
    %v581 = vpop.f32.mrb[0].mxu0
    %v582 = vadd.f32 %v443, %v581
    %v583 = vpop.f32.mrb[0].mxu0
    %584 = vmatprep.mubr.f32.mxu0 0.0
    %585 = vmatmul.mubr.f32.gmra.mrb[0].mxu0 %v405
    %v586 = vpop.f32.mrb[0].mxu0
    %v587 = vadd.f32 %v443, %v586
    %v588 = vpop.f32.mrb[0].mxu0
    %589 = vmatprep.mubr.f32.mxu0 0.0
    %590 = vmatmul.mubr.f32.gmra.mrb[0].mxu0 %v406
    %v591 = vpop.f32.mrb[0].mxu0
    %v592 = vadd.f32 %v443, %v591
    %v593 = vpop.f32.mrb[0].mxu0
    %594 = vmatprep.mubr.f32.mxu0 0.0
    %595 = vmatmul.mubr.f32.gmra.mrb[0].mxu0 %v407
    %v596 = vpop.f32.mrb[0].mxu0
    %v597 = vadd.f32 %v443, %v596
    %v598 = vpop.f32.mrb[0].mxu0
    %599 = vmatprep.mubr.f32.mxu0 0.0
    %600 = vmatmul.mubr.f32.gmra.mrb[0].mxu0 %v408
    %v601 = vpop.f32.mrb[0].mxu0
    %v602 = vadd.f32 %v443, %v601
    %v603 = vpop.f32.mrb[0].mxu0
    %604 = vmatprep.mubr.f32.mxu0 0.0
    %605 = vmatmul.mubr.f32.gmra.mrb[0].mxu0 %v409
    %v606 = vpop.f32.mrb[0].mxu0
    %v607 = vadd.f32 %v443, %v606
    %v608 = vpop.f32.mrb[0].mxu0
    %609 = vmatprep.mubr.f32.mxu0 0.0
    %610 = vmatmul.mubr.f32.gmra.mrb[0].mxu0 %v410
    %v611 = vpop.f32.mrb[0].mxu0
    %v612 = vadd.f32 %v443, %v611
    %v613 = vpop.f32.mrb[0].mxu0
    %614 = vmatprep.mubr.f32.mxu0 0.0
    %615 = vmatmul.mubr.f32.gmra.mrb[0].mxu0 %v411
    %v616 = vpop.f32.mrb[0].mxu0
    %v617 = vadd.f32 %v443, %v616
    %v618 = vpop.f32.mrb[0].mxu0
    %619 = vmatprep.mubr.f32.mxu0 0.0
    %620 = vmatmul.mubr.f32.gmra.mrb[0].mxu0 %v412
    %v621 = vpop.f32.mrb[0].mxu0
    %v622 = vadd.f32 %v443, %v621
    %v623 = vpop.f32.mrb[0].mxu0
    %624 = vmatprep.mubr.f32.mxu0 0.0
    %625 = vmatmul.mubr.f32.gmra.mrb[0].mxu0 %v413
    %v626 = vpop.f32.mrb[0].mxu0
    %v627 = vadd.f32 %v443, %v626
    %v628 = vpop.f32.mrb[0].mxu0
    %629 = vmatprep.mubr.f32.mxu0 0.0
    %630 = vmatmul.mubr.f32.gmra.mrb[0].mxu0 %v414
    %v631 = vpop.f32.mrb[0].mxu0
    %v632 = vadd.f32 %v443, %v631
    %v633 = vpop.f32.mrb[0].mxu0
    %634 = vmatprep.mubr.f32.mxu0 0.0
    %635 = vmatmul.mubr.f32.gmra.mrb[0].mxu0 %v415
    %v636 = vpop.f32.mrb[0].mxu0
    %v637 = vadd.f32 %v443, %v636
    %v638 = vpop.f32.mrb[0].mxu0
    %639 = vmatprep.mubr.f32.mxu0 0.0
    %640 = vmatmul.mubr.f32.gmra.mrb[0].mxu0 %v416
    %v641 = vpop.f32.mrb[0].mxu0
    %v642 = vadd.f32 %v443, %v641
    %v643 = vpop.f32.mrb[0].mxu0
    %644 = vmatprep.mubr.f32.mxu0 0.0
    %645 = vmatmul.mubr.f32.gmra.mrb[0].mxu0 %v417
    %v646 = vpop.f32.mrb[0].mxu0
    %v647 = vadd.f32 %v443, %v646
    %v648 = vpop.f32.mrb[0].mxu0
    %649 = vmatprep.mubr.f32.mxu0 0.0
    %650 = vmatmul.mubr.f32.gmra.mrb[0].mxu0 %v418
    %v651 = vpop.f32.mrb[0].mxu0
    %v652 = vadd.f32 %v443, %v651
    %v653 = vpop.f32.mrb[0].mxu0
    %654 = vmatprep.mubr.f32.mxu0 0.0
    %655 = vmatmul.mubr.f32.gmra.mrb[0].mxu0 %v419
    %v656 = vpop.f32.mrb[0].mxu0
    %v657 = vadd.f32 %v443, %v656
    %v658 = vpop.f32.mrb[0].mxu0
    %659 = vmatprep.mubr.f32.mxu0 0.0
    %660 = vmatmul.mubr.f32.gmra.mrb[0].mxu0 %v420
    %v661 = vpop.f32.mrb[0].mxu0
    %v662 = vadd.f32 %v443, %v661
    %v663 = vpop.f32.mrb[0].mxu0
    %664 = vmatprep.mubr.f32.mxu0 0.0
    %665 = vmatmul.mubr.f32.gmra.mrb[0].mxu0 %v421
    %v666 = vpop.f32.mrb[0].mxu0
    %v667 = vadd.f32 %v443, %v666
    %v668 = vpop.f32.mrb[0].mxu0
    %669 = vdwg.mxu0
    %v670 = vmax.f32 %v512, 0.0
    %v671 = vmax.f32 %v517, 0.0
    %v672 = vmax.f32 %v522, 0.0
    %v673 = vmax.f32 %v527, 0.0
    %v674 = vmax.f32 %v532, 0.0
    %v675 = vmax.f32 %v537, 0.0
    %v676 = vmax.f32 %v542, 0.0
    %v677 = vmax.f32 %v547, 0.0
    %v678 = vmax.f32 %v552, 0.0
    %v679 = vmax.f32 %v557, 0.0
    %v680 = vmax.f32 %v562, 0.0
    %v681 = vmax.f32 %v567, 0.0
    %v682 = vmax.f32 %v572, 0.0
    %v683 = vmax.f32 %v577, 0.0
    %v684 = vmax.f32 %v582, 0.0
    %v685 = vmax.f32 %v587, 0.0
    %v686 = vmax.f32 %v592, 0.0
    %v687 = vmax.f32 %v597, 0.0
    %v688 = vmax.f32 %v602, 0.0
    %v689 = vmax.f32 %v607, 0.0
    %v690 = vmax.f32 %v612, 0.0
    %v691 = vmax.f32 %v617, 0.0
    %v692 = vmax.f32 %v622, 0.0
    %v693 = vmax.f32 %v627, 0.0
    %v694 = vmax.f32 %v632, 0.0
    %v695 = vmax.f32 %v637, 0.0
    %v696 = vmax.f32 %v642, 0.0
    %v697 = vmax.f32 %v647, 0.0
    %v698 = vmax.f32 %v652, 0.0
    %v699 = vmax.f32 %v657, 0.0
    %v700 = vmax.f32 %v662, 0.0
    %v701 = vmax.f32 %v667, 0.0
    %v702 = vld [vmem:[%s5] sm:$0xff]
    %v703 = vld [vmem:[%s5 + $0x8] sm:$0xff]
    %v704 = vld [vmem:[%s5 + $0x10] sm:$0xff]
    %v705 = vld [vmem:[%s5 + $0x18] sm:$0xff]
    %v706 = vld [vmem:[%s5 + $0x20] sm:$0xff]
    %v707 = vld [vmem:[%s5 + $0x28] sm:$0xff]
    %v708 = vld [vmem:[%s5 + $0x30] sm:$0xff]
    %v709 = vld [vmem:[%s5 + $0x38] sm:$0xff]
    %v710 = vld [vmem:[%s5 + $0x40] sm:$0xff]
    %v711 = vld [vmem:[%s5 + $0x48] sm:$0xff]
    %v712 = vld [vmem:[%s5 + $0x50] sm:$0xff]
    %v713 = vld [vmem:[%s5 + $0x58] sm:$0xff]
    %v714 = vld [vmem:[%s5 + $0x60] sm:$0xff]
    %v715 = vld [vmem:[%s5 + $0x68] sm:$0xff]
    %v716 = vld [vmem:[%s5 + $0x70] sm:$0xff]
    %v717 = vld [vmem:[%s5 + $0x78] sm:$0xff]
    %v718 = vld [vmem:[%s6] sm:$0x1]
    %v720 = vlaneseq
    %v721 = vshrl.u32 %v720, 7
    %v722 = vsub.s32 0, %v721
    %v723 = vrot.slane %v718, %v722
    %725 = vmatprep.subr.mxu0 0.0
    %726 = vmatpush1.msra.mxu0 %v702
    %727 = vmatprep.subr.mxu0 0.0
    %728 = vmatpush1.msra.mxu0 %v703
    %729 = vmatprep.subr.mxu0 0.0
    %730 = vmatpush1.msra.mxu0 %v704
    %731 = vmatprep.subr.mxu0 0.0
    %732 = vmatpush1.msra.mxu0 %v705
    %733 = vmatprep.subr.mxu0 0.0
    %734 = vmatpush1.msra.mxu0 %v706
    %735 = vmatprep.subr.mxu0 0.0
    %736 = vmatpush1.msra.mxu0 %v707
    %737 = vmatprep.subr.mxu0 0.0
    %738 = vmatpush1.msra.mxu0 %v708
    %739 = vmatprep.subr.mxu0 0.0
    %740 = vmatpush1.msra.mxu0 %v709
    %741 = vmatprep.subr.mxu0 0.0
    %742 = vmatpush1.msra.mxu0 %v710
    %743 = vmatprep.subr.mxu0 0.0
    %744 = vmatpush1.msra.mxu0 %v711
    %745 = vmatprep.subr.mxu0 0.0
    %746 = vmatpush1.msra.mxu0 %v712
    %747 = vmatprep.subr.mxu0 0.0
    %748 = vmatpush1.msra.mxu0 %v713
    %749 = vmatprep.subr.mxu0 0.0
    %750 = vmatpush1.msra.mxu0 %v714
    %751 = vmatprep.subr.mxu0 0.0
    %752 = vmatpush1.msra.mxu0 %v715
    %753 = vmatprep.subr.mxu0 0.0
    %754 = vmatpush1.msra.mxu0 %v716
    %755 = vmatprep.subr.mxu0 0.0
    %756 = vmatpush1.msra.mxu0 %v717
    %757 = vmatprep.subr.mxu0 0.0
    %758 = vmatpush1.msra.mxu0 0.0
    %759 = vmatprep.subr.mxu0 0.0
    %760 = vmatpush1.msra.mxu0 0.0
    %761 = vmatprep.subr.mxu0 0.0
    %762 = vmatpush1.msra.mxu0 0.0
    %763 = vmatprep.subr.mxu0 0.0
    %764 = vmatpush1.msra.mxu0 0.0
    %765 = vmatprep.subr.mxu0 0.0
    %766 = vmatpush1.msra.mxu0 0.0
    %767 = vmatprep.subr.mxu0 0.0
    %768 = vmatpush1.msra.mxu0 0.0
    %769 = vmatprep.subr.mxu0 0.0
    %770 = vmatpush1.msra.mxu0 0.0
    %771 = vmatprep.subr.mxu0 0.0
    %772 = vmatpush1.msra.mxu0 0.0
    %773 = vmatprep.subr.mxu0 0.0
    %774 = vmatpush1.msra.mxu0 0.0
    %775 = vmatprep.subr.mxu0 0.0
    %776 = vmatpush1.msra.mxu0 0.0
    %777 = vmatprep.subr.mxu0 0.0
    %778 = vmatpush1.msra.mxu0 0.0
    %779 = vmatprep.subr.mxu0 0.0
    %780 = vmatpush1.msra.mxu0 0.0
    %781 = vmatprep.subr.mxu0 0.0
    %782 = vmatpush1.msra.mxu0 0.0
    %783 = vmatprep.subr.mxu0 0.0
    %784 = vmatpush1.msra.mxu0 0.0
    %785 = vmatprep.subr.mxu0 0.0
    %786 = vmatpush1.msra.mxu0 0.0
    %787 = vmatprep.subr.mxu0 0.0
    %788 = vmatpush1.msra.mxu0 0.0
    %789 = vmatprep.mubr.f32.mxu0 0.0
    %790 = vmatmul.mubr.f32.gmra.mrb[0].mxu0 %v670
    %v791 = vpop.f32.mrb[0].mxu0
    %v792 = vadd.f32 %v723, %v791
    %v793 = vpop.f32.mrb[0].mxu0
    %794 = vmatprep.mubr.f32.mxu0 0.0
    %795 = vmatmul.mubr.f32.gmra.mrb[0].mxu0 %v671
    %v796 = vpop.f32.mrb[0].mxu0
    %v797 = vadd.f32 %v723, %v796
    %v798 = vpop.f32.mrb[0].mxu0
    %799 = vmatprep.mubr.f32.mxu0 0.0
    %800 = vmatmul.mubr.f32.gmra.mrb[0].mxu0 %v672
    %v801 = vpop.f32.mrb[0].mxu0
    %v802 = vadd.f32 %v723, %v801
    %v803 = vpop.f32.mrb[0].mxu0
    %804 = vmatprep.mubr.f32.mxu0 0.0
    %805 = vmatmul.mubr.f32.gmra.mrb[0].mxu0 %v673
    %v806 = vpop.f32.mrb[0].mxu0
    %v807 = vadd.f32 %v723, %v806
    %v808 = vpop.f32.mrb[0].mxu0
    %809 = vmatprep.mubr.f32.mxu0 0.0
    %810 = vmatmul.mubr.f32.gmra.mrb[0].mxu0 %v674
    %v811 = vpop.f32.mrb[0].mxu0
    %v812 = vadd.f32 %v723, %v811
    %v813 = vpop.f32.mrb[0].mxu0
    %814 = vmatprep.mubr.f32.mxu0 0.0
    %815 = vmatmul.mubr.f32.gmra.mrb[0].mxu0 %v675
    %v816 = vpop.f32.mrb[0].mxu0
    %v817 = vadd.f32 %v723, %v816
    %v818 = vpop.f32.mrb[0].mxu0
    %819 = vmatprep.mubr.f32.mxu0 0.0
    %820 = vmatmul.mubr.f32.gmra.mrb[0].mxu0 %v676
    %v821 = vpop.f32.mrb[0].mxu0
    %v822 = vadd.f32 %v723, %v821
    %v823 = vpop.f32.mrb[0].mxu0
    %824 = vmatprep.mubr.f32.mxu0 0.0
    %825 = vmatmul.mubr.f32.gmra.mrb[0].mxu0 %v677
    %v826 = vpop.f32.mrb[0].mxu0
    %v827 = vadd.f32 %v723, %v826
    %v828 = vpop.f32.mrb[0].mxu0
    %829 = vmatprep.mubr.f32.mxu0 0.0
    %830 = vmatmul.mubr.f32.gmra.mrb[0].mxu0 %v678
    %v831 = vpop.f32.mrb[0].mxu0
    %v832 = vadd.f32 %v723, %v831
    %v833 = vpop.f32.mrb[0].mxu0
    %834 = vmatprep.mubr.f32.mxu0 0.0
    %835 = vmatmul.mubr.f32.gmra.mrb[0].mxu0 %v679
    %v836 = vpop.f32.mrb[0].mxu0
    %v837 = vadd.f32 %v723, %v836
    %v838 = vpop.f32.mrb[0].mxu0
    %839 = vmatprep.mubr.f32.mxu0 0.0
    %840 = vmatmul.mubr.f32.gmra.mrb[0].mxu0 %v680
    %v841 = vpop.f32.mrb[0].mxu0
    %v842 = vadd.f32 %v723, %v841
    %v843 = vpop.f32.mrb[0].mxu0
    %844 = vmatprep.mubr.f32.mxu0 0.0
    %845 = vmatmul.mubr.f32.gmra.mrb[0].mxu0 %v681
    %v846 = vpop.f32.mrb[0].mxu0
    %v847 = vadd.f32 %v723, %v846
    %v848 = vpop.f32.mrb[0].mxu0
    %849 = vmatprep.mubr.f32.mxu0 0.0
    %850 = vmatmul.mubr.f32.gmra.mrb[0].mxu0 %v682
    %v851 = vpop.f32.mrb[0].mxu0
    %v852 = vadd.f32 %v723, %v851
    %v853 = vpop.f32.mrb[0].mxu0
    %854 = vmatprep.mubr.f32.mxu0 0.0
    %855 = vmatmul.mubr.f32.gmra.mrb[0].mxu0 %v683
    %v856 = vpop.f32.mrb[0].mxu0
    %v857 = vadd.f32 %v723, %v856
    %v858 = vpop.f32.mrb[0].mxu0
    %859 = vmatprep.mubr.f32.mxu0 0.0
    %860 = vmatmul.mubr.f32.gmra.mrb[0].mxu0 %v684
    %v861 = vpop.f32.mrb[0].mxu0
    %v862 = vadd.f32 %v723, %v861
    %v863 = vpop.f32.mrb[0].mxu0
    %864 = vmatprep.mubr.f32.mxu0 0.0
    %865 = vmatmul.mubr.f32.gmra.mrb[0].mxu0 %v685
    %v866 = vpop.f32.mrb[0].mxu0
    %v867 = vadd.f32 %v723, %v866
    %v868 = vpop.f32.mrb[0].mxu0
    %869 = vmatprep.mubr.f32.mxu0 0.0
    %870 = vmatmul.mubr.f32.gmra.mrb[0].mxu0 %v686
    %v871 = vpop.f32.mrb[0].mxu0
    %v872 = vadd.f32 %v723, %v871
    %v873 = vpop.f32.mrb[0].mxu0
    %874 = vmatprep.mubr.f32.mxu0 0.0
    %875 = vmatmul.mubr.f32.gmra.mrb[0].mxu0 %v687
    %v876 = vpop.f32.mrb[0].mxu0
    %v877 = vadd.f32 %v723, %v876
    %v878 = vpop.f32.mrb[0].mxu0
    %879 = vmatprep.mubr.f32.mxu0 0.0
    %880 = vmatmul.mubr.f32.gmra.mrb[0].mxu0 %v688
    %v881 = vpop.f32.mrb[0].mxu0
    %v882 = vadd.f32 %v723, %v881
    %v883 = vpop.f32.mrb[0].mxu0
    %884 = vmatprep.mubr.f32.mxu0 0.0
    %885 = vmatmul.mubr.f32.gmra.mrb[0].mxu0 %v689
    %v886 = vpop.f32.mrb[0].mxu0
    %v887 = vadd.f32 %v723, %v886
    %v888 = vpop.f32.mrb[0].mxu0
    %889 = vmatprep.mubr.f32.mxu0 0.0
    %890 = vmatmul.mubr.f32.gmra.mrb[0].mxu0 %v690
    %v891 = vpop.f32.mrb[0].mxu0
    %v892 = vadd.f32 %v723, %v891
    %v893 = vpop.f32.mrb[0].mxu0
    %894 = vmatprep.mubr.f32.mxu0 0.0
    %895 = vmatmul.mubr.f32.gmra.mrb[0].mxu0 %v691
    %v896 = vpop.f32.mrb[0].mxu0
    %v897 = vadd.f32 %v723, %v896
    %v898 = vpop.f32.mrb[0].mxu0
    %899 = vmatprep.mubr.f32.mxu0 0.0
    %900 = vmatmul.mubr.f32.gmra.mrb[0].mxu0 %v692
    %v901 = vpop.f32.mrb[0].mxu0
    %v902 = vadd.f32 %v723, %v901
    %v903 = vpop.f32.mrb[0].mxu0
    %904 = vmatprep.mubr.f32.mxu0 0.0
    %905 = vmatmul.mubr.f32.gmra.mrb[0].mxu0 %v693
    %v906 = vpop.f32.mrb[0].mxu0
    %v907 = vadd.f32 %v723, %v906
    %v908 = vpop.f32.mrb[0].mxu0
    %909 = vmatprep.mubr.f32.mxu0 0.0
    %910 = vmatmul.mubr.f32.gmra.mrb[0].mxu0 %v694
    %v911 = vpop.f32.mrb[0].mxu0
    %v912 = vadd.f32 %v723, %v911
    %v913 = vpop.f32.mrb[0].mxu0
    %914 = vmatprep.mubr.f32.mxu0 0.0
    %915 = vmatmul.mubr.f32.gmra.mrb[0].mxu0 %v695
    %v916 = vpop.f32.mrb[0].mxu0
    %v917 = vadd.f32 %v723, %v916
    %v918 = vpop.f32.mrb[0].mxu0
    %919 = vmatprep.mubr.f32.mxu0 0.0
    %920 = vmatmul.mubr.f32.gmra.mrb[0].mxu0 %v696
    %v921 = vpop.f32.mrb[0].mxu0
    %v922 = vadd.f32 %v723, %v921
    %v923 = vpop.f32.mrb[0].mxu0
    %924 = vmatprep.mubr.f32.mxu0 0.0
    %925 = vmatmul.mubr.f32.gmra.mrb[0].mxu0 %v697
    %v926 = vpop.f32.mrb[0].mxu0
    %v927 = vadd.f32 %v723, %v926
    %v928 = vpop.f32.mrb[0].mxu0
    %929 = vmatprep.mubr.f32.mxu0 0.0
    %930 = vmatmul.mubr.f32.gmra.mrb[0].mxu0 %v698
    %v931 = vpop.f32.mrb[0].mxu0
    %v932 = vadd.f32 %v723, %v931
    %v933 = vpop.f32.mrb[0].mxu0
    %934 = vmatprep.mubr.f32.mxu0 0.0
    %935 = vmatmul.mubr.f32.gmra.mrb[0].mxu0 %v699
    %v936 = vpop.f32.mrb[0].mxu0
    %v937 = vadd.f32 %v723, %v936
    %v938 = vpop.f32.mrb[0].mxu0
    %939 = vmatprep.mubr.f32.mxu0 0.0
    %940 = vmatmul.mubr.f32.gmra.mrb[0].mxu0 %v700
    %v941 = vpop.f32.mrb[0].mxu0
    %v942 = vadd.f32 %v723, %v941
    %v943 = vpop.f32.mrb[0].mxu0
    %944 = vmatprep.mubr.f32.mxu0 0.0
    %945 = vmatmul.mubr.f32.gmra.mrb[0].mxu0 %v701
    %v946 = vpop.f32.mrb[0].mxu0
    %v947 = vadd.f32 %v723, %v946
    %v948 = vpop.f32.mrb[0].mxu0
    %949 = vdwg.mxu0
    %950 = vst [vmem:[#allocation2] sm:$0xff] %v792
    %951 = vst [vmem:[#allocation2 + $0x8] sm:$0xff] %v797
    %952 = vst [vmem:[#allocation2 + $0x10] sm:$0xff] %v802
    %953 = vst [vmem:[#allocation2 + $0x18] sm:$0xff] %v807
    %954 = vst [vmem:[#allocation2 + $0x20] sm:$0xff] %v812
    %955 = vst [vmem:[#allocation2 + $0x28] sm:$0xff] %v817
    %956 = vst [vmem:[#allocation2 + $0x30] sm:$0xff] %v822
    %957 = vst [vmem:[#allocation2 + $0x38] sm:$0xff] %v827
    %958 = vst [vmem:[#allocation2 + $0x40] sm:$0xff] %v832
    %959 = vst [vmem:[#allocation2 + $0x48] sm:$0xff] %v837
    %960 = vst [vmem:[#allocation2 + $0x50] sm:$0xff] %v842
    %961 = vst [vmem:[#allocation2 + $0x58] sm:$0xff] %v847
    %962 = vst [vmem:[#allocation2 + $0x60] sm:$0xff] %v852
    %963 = vst [vmem:[#allocation2 + $0x68] sm:$0xff] %v857
    %964 = vst [vmem:[#allocation2 + $0x70] sm:$0xff] %v862
    %965 = vst [vmem:[#allocation2 + $0x78] sm:$0xff] %v867
    %966 = vst [vmem:[#allocation2 + $0x80] sm:$0xff] %v872
    %967 = vst [vmem:[#allocation2 + $0x88] sm:$0xff] %v877
    %968 = vst [vmem:[#allocation2 + $0x90] sm:$0xff] %v882
    %969 = vst [vmem:[#allocation2 + $0x98] sm:$0xff] %v887
    %970 = vst [vmem:[#allocation2 + $0xa0] sm:$0xff] %v892
    %971 = vst [vmem:[#allocation2 + $0xa8] sm:$0xff] %v897
    %972 = vst [vmem:[#allocation2 + $0xb0] sm:$0xff] %v902
    %973 = vst [vmem:[#allocation2 + $0xb8] sm:$0xff] %v907
    %974 = vst [vmem:[#allocation2 + $0xc0] sm:$0xff] %v912
    %975 = vst [vmem:[#allocation2 + $0xc8] sm:$0xff] %v917
    %976 = vst [vmem:[#allocation2 + $0xd0] sm:$0xff] %v922
    %977 = vst [vmem:[#allocation2 + $0xd8] sm:$0xff] %v927
    %978 = vst [vmem:[#allocation2 + $0xe0] sm:$0xff] %v932
    %979 = vst [vmem:[#allocation2 + $0xe8] sm:$0xff] %v937
    %980 = vst [vmem:[#allocation2 + $0xf0] sm:$0xff] %v942
    %981 = vst [vmem:[#allocation2 + $0xf8] sm:$0xff] %v947
    // Predicated region
    $region30: #{tpu_custom_call.1} parent=1 // pred_check
      _
    $region31: #{tpu_custom_call.1} parent=1 // pred_check_branch
      %983 = sbr.rel (0) target = $region33
    $region32: #{tpu_custom_call.1} parent=1 // pred_region
      %s985 = ssub.s32 4096, 4096
      %986 = vsyncadd [#allocation3], %s985
      %s987 = sshll.u32 [#allocation2], 4
      %s988 = int_to_ptr.vmem [resolvable:$true] %s987
      %993 = dma.vmem_to_hbm [thread:$0]  %s988, 4096, %s7, [#allocation3], 128, 128, 8
    $region33: #{tpu_custom_call.1} parent=1 // pred_fallthru
      _
    // Predicated region
    $region34: #{tpu_custom_call.1} parent=1 // pred_check
      _
    $region35: #{tpu_custom_call.1} parent=1 // pred_check_branch
      %995 = sbr.rel (0) target = $region37
    $region36: #{tpu_custom_call.1} parent=1 // pred_region
      %996 = dma.done [#allocation3], 4096
    $region37: #{tpu_custom_call.1} parent=1 // pred_fallthru
      _
    %997 = vsyncpa [#allocation3], 1

// kernel: tpu_custom_call.1
$region0: #{tpu_custom_call.1}
  #allocation0 [shape = 'u32[]', space=smem, size = 0x4, offset = 0x4, fixed_abs, tag = 'smem constant byte address 0x4 - core index']
  #allocation1 [shape = 'u32[144,128]{1,0:T(1,128)}', space=vmem, size = 0x12000, scoped, tag = 'internal scratch']
  %s0 = inlined_call_operand.vmem [shape: f32[256,16], index: 0, kind: input, shape index: {}]
  %s1 = inlined_call_operand.vmem [shape: f32[16,128], index: 1, kind: input, shape index: {}]
  %s2 = inlined_call_operand.vmem [shape: f32[1,128], index: 2, kind: input, shape index: {}]
  %s3 = inlined_call_operand.vmem [shape: f32[128,128], index: 3, kind: input, shape index: {}]
  %s4 = inlined_call_operand.vmem [shape: f32[1,128], index: 4, kind: input, shape index: {}]
  %s5 = inlined_call_operand.vmem [shape: f32[128,128], index: 5, kind: input, shape index: {}]
  %s6 = inlined_call_operand.vmem [shape: f32[1,128], index: 6, kind: input, shape index: {}]
  %s7 = inlined_call_operand.hbm [shape: f32[256,128], index: 7, kind: output, shape index: {}]
  %s8 = sld [smem:[#allocation0]]
  $region38: #{tpu_custom_call.1} parent=0
    _
  %s10 = ssub.s32 1, %s8
  %s11 = scalar_select 0, %s10, %s8
  $region1: #{tpu_custom_call.1} parent=0
    #allocation2 [shape = 'u8[131072]{0}', space=vmem, size = 0x20000, scoped, tag = 'output window, operand 0, single buffered']
    #allocation3 [shape = 's32[1]{0}', space=sflag, size = 0x4, scoped, tag = 'scoped memory for tpu_custom_call.1']
    %12 = vsyncpa [#allocation3], 0
    // Predicated region
    $region2: #{tpu_custom_call.1} parent=1 // pred_check
      _
    $region3: #{tpu_custom_call.1} parent=1 // pred_check_branch
      %14 = sbr.rel (0) target = $region5
    $region4: #{tpu_custom_call.1} parent=1 // pred_region
      _
    $region5: #{tpu_custom_call.1} parent=1 // pred_fallthru
      _
    // Predicated region
    $region6: #{tpu_custom_call.1} parent=1 // pred_check
      _
    $region7: #{tpu_custom_call.1} parent=1 // pred_check_branch
      %16 = sbr.rel (0) target = $region9
    $region8: #{tpu_custom_call.1} parent=1 // pred_region
      _
    $region9: #{tpu_custom_call.1} parent=1 // pred_fallthru
      _
    // Predicated region
    $region10: #{tpu_custom_call.1} parent=1 // pred_check
      _
    $region11: #{tpu_custom_call.1} parent=1 // pred_check_branch
      %18 = sbr.rel (0) target = $region13
    $region12: #{tpu_custom_call.1} parent=1 // pred_region
      _
    $region13: #{tpu_custom_call.1} parent=1 // pred_fallthru
      _
    // Predicated region
    $region14: #{tpu_custom_call.1} parent=1 // pred_check
      _
    $region15: #{tpu_custom_call.1} parent=1 // pred_check_branch
      %20 = sbr.rel (0) target = $region17
    $region16: #{tpu_custom_call.1} parent=1 // pred_region
      _
    $region17: #{tpu_custom_call.1} parent=1 // pred_fallthru
      _
    // Predicated region
    $region18: #{tpu_custom_call.1} parent=1 // pred_check
      _
    $region19: #{tpu_custom_call.1} parent=1 // pred_check_branch
      %22 = sbr.rel (0) target = $region21
    $region20: #{tpu_custom_call.1} parent=1 // pred_region
      _
    $region21: #{tpu_custom_call.1} parent=1 // pred_fallthru
      _
    // Predicated region
    $region22: #{tpu_custom_call.1} parent=1 // pred_check
      _
    $region23: #{tpu_custom_call.1} parent=1 // pred_check_branch
      %24 = sbr.rel (0) target = $region25
    $region24: #{tpu_custom_call.1} parent=1 // pred_region
      _
    $region25: #{tpu_custom_call.1} parent=1 // pred_fallthru
      _
    // Predicated region
    $region26: #{tpu_custom_call.1} parent=1 // pred_check
      _
    $region27: #{tpu_custom_call.1} parent=1 // pred_check_branch
      %26 = sbr.rel (0) target = $region29
    $region28: #{tpu_custom_call.1} parent=1 // pred_region
      _
    $region29: #{tpu_custom_call.1} parent=1 // pred_fallthru
      _
    %v27 = vld [vmem:[%s0] sm:$0xff]
    %v28 = vld [vmem:[%s0 + $0x8] sm:$0xff]
    %v29 = vld [vmem:[%s0 + $0x10] sm:$0xff]
    %v30 = vld [vmem:[%s0 + $0x18] sm:$0xff]
    %v31 = vld [vmem:[%s0 + $0x20] sm:$0xff]
    %v32 = vld [vmem:[%s0 + $0x28] sm:$0xff]
    %v33 = vld [vmem:[%s0 + $0x30] sm:$0xff]
    %v34 = vld [vmem:[%s0 + $0x38] sm:$0xff]
    %v35 = vld [vmem:[%s0 + $0x40] sm:$0xff]
    %v36 = vld [vmem:[%s0 + $0x48] sm:$0xff]
    %v37 = vld [vmem:[%s0 + $0x50] sm:$0xff]
    %v38 = vld [vmem:[%s0 + $0x58] sm:$0xff]
    %v39 = vld [vmem:[%s0 + $0x60] sm:$0xff]
    %v40 = vld [vmem:[%s0 + $0x68] sm:$0xff]
    %v41 = vld [vmem:[%s0 + $0x70] sm:$0xff]
    %v42 = vld [vmem:[%s0 + $0x78] sm:$0xff]
    %v43 = vld [vmem:[%s0 + $0x80] sm:$0xff]
    %v44 = vld [vmem:[%s0 + $0x88] sm:$0xff]
    %v45 = vld [vmem:[%s0 + $0x90] sm:$0xff]
    %v46 = vld [vmem:[%s0 + $0x98] sm:$0xff]
    %v47 = vld [vmem:[%s0 + $0xa0] sm:$0xff]
    %v48 = vld [vmem:[%s0 + $0xa8] sm:$0xff]
    %v49 = vld [vmem:[%s0 + $0xb0] sm:$0xff]
    %v50 = vld [vmem:[%s0 + $0xb8] sm:$0xff]
    %v51 = vld [vmem:[%s0 + $0xc0] sm:$0xff]
    %v52 = vld [vmem:[%s0 + $0xc8] sm:$0xff]
    %v53 = vld [vmem:[%s0 + $0xd0] sm:$0xff]
    %v54 = vld [vmem:[%s0 + $0xd8] sm:$0xff]
    %v55 = vld [vmem:[%s0 + $0xe0] sm:$0xff]
    %v56 = vld [vmem:[%s0 + $0xe8] sm:$0xff]
    %v57 = vld [vmem:[%s0 + $0xf0] sm:$0xff]
    %v58 = vld [vmem:[%s0 + $0xf8] sm:$0xff]
    %v59 = vld [vmem:[%s1] sm:$0xff]
    %v60 = vld [vmem:[%s1 + $0x8] sm:$0xff]
    %v61 = vld [vmem:[%s2] sm:$0x1]
    %v63 = vlaneseq
    %v64 = vshrl.u32 %v63, 7
    %v65 = vsub.s32 0, %v64
    %v66 = vrot.slane %v61, %v65
    %vm68 = vcmask 130048
    %v70 = vsel %vm68, %v27, 0
    %v73 = vsel %vm68, %v28, 0
    %v76 = vsel %vm68, %v29, 0
    %v79 = vsel %vm68, %v30, 0
    %v82 = vsel %vm68, %v31, 0
    %v85 = vsel %vm68, %v32, 0
    %v88 = vsel %vm68, %v33, 0
    %v91 = vsel %vm68, %v34, 0
    %v94 = vsel %vm68, %v35, 0
    %v97 = vsel %vm68, %v36, 0
    %v100 = vsel %vm68, %v37, 0
    %v103 = vsel %vm68, %v38, 0
    %v106 = vsel %vm68, %v39, 0
    %v109 = vsel %vm68, %v40, 0
    %v112 = vsel %vm68, %v41, 0
    %v115 = vsel %vm68, %v42, 0
    %v118 = vsel %vm68, %v43, 0
    %v121 = vsel %vm68, %v44, 0
    %v124 = vsel %vm68, %v45, 0
    %v127 = vsel %vm68, %v46, 0
    %v130 = vsel %vm68, %v47, 0
    %v133 = vsel %vm68, %v48, 0
    %v136 = vsel %vm68, %v49, 0
    %v139 = vsel %vm68, %v50, 0
    %v142 = vsel %vm68, %v51, 0
    %v145 = vsel %vm68, %v52, 0
    %v148 = vsel %vm68, %v53, 0
    %v151 = vsel %vm68, %v54, 0
    %v154 = vsel %vm68, %v55, 0
    %v157 = vsel %vm68, %v56, 0
    %v160 = vsel %vm68, %v57, 0
    %v163 = vsel %vm68, %v58, 0
    %165 = vmatprep.subr.mxu0 0.0
    %166 = vmatpush1.msra.mxu0 %v59
    %167 = vmatprep.subr.mxu0 0.0
    %168 = vmatpush1.msra.mxu0 %v60
    %169 = vmatprep.subr.mxu0 0.0
    %170 = vmatpush1.msra.mxu0 0.0
    %171 = vmatprep.subr.mxu0 0.0
    %172 = vmatpush1.msra.mxu0 0.0
    %173 = vmatprep.subr.mxu0 0.0
    %174 = vmatpush1.msra.mxu0 0.0
    %175 = vmatprep.subr.mxu0 0.0
    %176 = vmatpush1.msra.mxu0 0.0
    %177 = vmatprep.subr.mxu0 0.0
    %178 = vmatpush1.msra.mxu0 0.0
    %179 = vmatprep.subr.mxu0 0.0
    %180 = vmatpush1.msra.mxu0 0.0
    %181 = vmatprep.subr.mxu0 0.0
    %182 = vmatpush1.msra.mxu0 0.0
    %183 = vmatprep.subr.mxu0 0.0
    %184 = vmatpush1.msra.mxu0 0.0
    %185 = vmatprep.subr.mxu0 0.0
    %186 = vmatpush1.msra.mxu0 0.0
    %187 = vmatprep.subr.mxu0 0.0
    %188 = vmatpush1.msra.mxu0 0.0
    %189 = vmatprep.subr.mxu0 0.0
    %190 = vmatpush1.msra.mxu0 0.0
    %191 = vmatprep.subr.mxu0 0.0
    %192 = vmatpush1.msra.mxu0 0.0
    %193 = vmatprep.subr.mxu0 0.0
    %194 = vmatpush1.msra.mxu0 0.0
    %195 = vmatprep.subr.mxu0 0.0
    %196 = vmatpush1.msra.mxu0 0.0
    %197 = vmatprep.subr.mxu0 0.0
    %198 = vmatpush1.msra.mxu0 0.0
    %199 = vmatprep.subr.mxu0 0.0
    %200 = vmatpush1.msra.mxu0 0.0
    %201 = vmatprep.subr.mxu0 0.0
    %202 = vmatpush1.msra.mxu0 0.0
    %203 = vmatprep.subr.mxu0 0.0
    %204 = vmatpush1.msra.mxu0 0.0
    %205 = vmatprep.subr.mxu0 0.0
    %206 = vmatpush1.msra.mxu0 0.0
    %207 = vmatprep.subr.mxu0 0.0
    %208 = vmatpush1.msra.mxu0 0.0
    %209 = vmatprep.subr.mxu0 0.0
    %210 = vmatpush1.msra.mxu0 0.0
    %211 = vmatprep.subr.mxu0 0.0
    %212 = vmatpush1.msra.mxu0 0.0
    %213 = vmatprep.subr.mxu0 0.0
    %214 = vmatpush1.msra.mxu0 0.0
    %215 = vmatprep.subr.mxu0 0.0
    %216 = vmatpush1.msra.mxu0 0.0
    %217 = vmatprep.subr.mxu0 0.0
    %218 = vmatpush1.msra.mxu0 0.0
    %219 = vmatprep.subr.mxu0 0.0
    %220 = vmatpush1.msra.mxu0 0.0
    %221 = vmatprep.subr.mxu0 0.0
    %222 = vmatpush1.msra.mxu0 0.0
    %223 = vmatprep.subr.mxu0 0.0
    %224 = vmatpush1.msra.mxu0 0.0
    %225 = vmatprep.subr.mxu0 0.0
    %226 = vmatpush1.msra.mxu0 0.0
    %227 = vmatprep.subr.mxu0 0.0
    %228 = vmatpush1.msra.mxu0 0.0
    %229 = vmatprep.mubr.f32.mxu0 0.0
    %230 = vmatmul.mubr.f32.gmra.mrb[0].mxu0 %v70
    %v231 = vpop.f32.mrb[0].mxu0
    %v232 = vadd.f32 %v66, %v231
    %v233 = vpop.f32.mrb[0].mxu0
    %234 = vmatprep.mubr.f32.mxu0 0.0
    %235 = vmatmul.mubr.f32.gmra.mrb[0].mxu0 %v73
    %v236 = vpop.f32.mrb[0].mxu0
    %v237 = vadd.f32 %v66, %v236
    %v238 = vpop.f32.mrb[0].mxu0
    %239 = vmatprep.mubr.f32.mxu0 0.0
    %240 = vmatmul.mubr.f32.gmra.mrb[0].mxu0 %v76
    %v241 = vpop.f32.mrb[0].mxu0
    %v242 = vadd.f32 %v66, %v241
    %v243 = vpop.f32.mrb[0].mxu0
    %244 = vmatprep.mubr.f32.mxu0 0.0
    %245 = vmatmul.mubr.f32.gmra.mrb[0].mxu0 %v79
    %v246 = vpop.f32.mrb[0].mxu0
    %v247 = vadd.f32 %v66, %v246
    %v248 = vpop.f32.mrb[0].mxu0
    %249 = vmatprep.mubr.f32.mxu0 0.0
    %250 = vmatmul.mubr.f32.gmra.mrb[0].mxu0 %v82
    %v251 = vpop.f32.mrb[0].mxu0
    %v252 = vadd.f32 %v66, %v251
    %v253 = vpop.f32.mrb[0].mxu0
    %254 = vmatprep.mubr.f32.mxu0 0.0
    %255 = vmatmul.mubr.f32.gmra.mrb[0].mxu0 %v85
    %v256 = vpop.f32.mrb[0].mxu0
    %v257 = vadd.f32 %v66, %v256
    %v258 = vpop.f32.mrb[0].mxu0
    %259 = vmatprep.mubr.f32.mxu0 0.0
    %260 = vmatmul.mubr.f32.gmra.mrb[0].mxu0 %v88
    %v261 = vpop.f32.mrb[0].mxu0
    %v262 = vadd.f32 %v66, %v261
    %v263 = vpop.f32.mrb[0].mxu0
    %264 = vmatprep.mubr.f32.mxu0 0.0
    %265 = vmatmul.mubr.f32.gmra.mrb[0].mxu0 %v91
    %v266 = vpop.f32.mrb[0].mxu0
    %v267 = vadd.f32 %v66, %v266
    %v268 = vpop.f32.mrb[0].mxu0
    %269 = vmatprep.mubr.f32.mxu0 0.0
    %270 = vmatmul.mubr.f32.gmra.mrb[0].mxu0 %v94
    %v271 = vpop.f32.mrb[0].mxu0
    %v272 = vadd.f32 %v66, %v271
    %v273 = vpop.f32.mrb[0].mxu0
    %274 = vmatprep.mubr.f32.mxu0 0.0
    %275 = vmatmul.mubr.f32.gmra.mrb[0].mxu0 %v97
    %v276 = vpop.f32.mrb[0].mxu0
    %v277 = vadd.f32 %v66, %v276
    %v278 = vpop.f32.mrb[0].mxu0
    %279 = vmatprep.mubr.f32.mxu0 0.0
    %280 = vmatmul.mubr.f32.gmra.mrb[0].mxu0 %v100
    %v281 = vpop.f32.mrb[0].mxu0
    %v282 = vadd.f32 %v66, %v281
    %v283 = vpop.f32.mrb[0].mxu0
    %284 = vmatprep.mubr.f32.mxu0 0.0
    %285 = vmatmul.mubr.f32.gmra.mrb[0].mxu0 %v103
    %v286 = vpop.f32.mrb[0].mxu0
    %v287 = vadd.f32 %v66, %v286
    %v288 = vpop.f32.mrb[0].mxu0
    %289 = vmatprep.mubr.f32.mxu0 0.0
    %290 = vmatmul.mubr.f32.gmra.mrb[0].mxu0 %v106
    %v291 = vpop.f32.mrb[0].mxu0
    %v292 = vadd.f32 %v66, %v291
    %v293 = vpop.f32.mrb[0].mxu0
    %294 = vmatprep.mubr.f32.mxu0 0.0
    %295 = vmatmul.mubr.f32.gmra.mrb[0].mxu0 %v109
    %v296 = vpop.f32.mrb[0].mxu0
    %v297 = vadd.f32 %v66, %v296
    %v298 = vpop.f32.mrb[0].mxu0
    %299 = vmatprep.mubr.f32.mxu0 0.0
    %300 = vmatmul.mubr.f32.gmra.mrb[0].mxu0 %v112
    %v301 = vpop.f32.mrb[0].mxu0
    %v302 = vadd.f32 %v66, %v301
    %v303 = vpop.f32.mrb[0].mxu0
    %304 = vmatprep.mubr.f32.mxu0 0.0
    %305 = vmatmul.mubr.f32.gmra.mrb[0].mxu0 %v115
    %v306 = vpop.f32.mrb[0].mxu0
    %v307 = vadd.f32 %v66, %v306
    %v308 = vpop.f32.mrb[0].mxu0
    %309 = vmatprep.mubr.f32.mxu0 0.0
    %310 = vmatmul.mubr.f32.gmra.mrb[0].mxu0 %v118
    %v311 = vpop.f32.mrb[0].mxu0
    %v312 = vadd.f32 %v66, %v311
    %v313 = vpop.f32.mrb[0].mxu0
    %314 = vmatprep.mubr.f32.mxu0 0.0
    %315 = vmatmul.mubr.f32.gmra.mrb[0].mxu0 %v121
    %v316 = vpop.f32.mrb[0].mxu0
    %v317 = vadd.f32 %v66, %v316
    %v318 = vpop.f32.mrb[0].mxu0
    %319 = vmatprep.mubr.f32.mxu0 0.0
    %320 = vmatmul.mubr.f32.gmra.mrb[0].mxu0 %v124
    %v321 = vpop.f32.mrb[0].mxu0
    %v322 = vadd.f32 %v66, %v321
    %v323 = vpop.f32.mrb[0].mxu0
    %324 = vmatprep.mubr.f32.mxu0 0.0
    %325 = vmatmul.mubr.f32.gmra.mrb[0].mxu0 %v127
    %v326 = vpop.f32.mrb[0].mxu0
    %v327 = vadd.f32 %v66, %v326
    %v328 = vpop.f32.mrb[0].mxu0
    %329 = vmatprep.mubr.f32.mxu0 0.0
    %330 = vmatmul.mubr.f32.gmra.mrb[0].mxu0 %v130
    %v331 = vpop.f32.mrb[0].mxu0
    %v332 = vadd.f32 %v66, %v331
    %v333 = vpop.f32.mrb[0].mxu0
    %334 = vmatprep.mubr.f32.mxu0 0.0
    %335 = vmatmul.mubr.f32.gmra.mrb[0].mxu0 %v133
    %v336 = vpop.f32.mrb[0].mxu0
    %v337 = vadd.f32 %v66, %v336
    %v338 = vpop.f32.mrb[0].mxu0
    %339 = vmatprep.mubr.f32.mxu0 0.0
    %340 = vmatmul.mubr.f32.gmra.mrb[0].mxu0 %v136
    %v341 = vpop.f32.mrb[0].mxu0
    %v342 = vadd.f32 %v66, %v341
    %v343 = vpop.f32.mrb[0].mxu0
    %344 = vmatprep.mubr.f32.mxu0 0.0
    %345 = vmatmul.mubr.f32.gmra.mrb[0].mxu0 %v139
    %v346 = vpop.f32.mrb[0].mxu0
    %v347 = vadd.f32 %v66, %v346
    %v348 = vpop.f32.mrb[0].mxu0
    %349 = vmatprep.mubr.f32.mxu0 0.0
    %350 = vmatmul.mubr.f32.gmra.mrb[0].mxu0 %v142
    %v351 = vpop.f32.mrb[0].mxu0
    %v352 = vadd.f32 %v66, %v351
    %v353 = vpop.f32.mrb[0].mxu0
    %354 = vmatprep.mubr.f32.mxu0 0.0
    %355 = vmatmul.mubr.f32.gmra.mrb[0].mxu0 %v145
    %v356 = vpop.f32.mrb[0].mxu0
    %v357 = vadd.f32 %v66, %v356
    %v358 = vpop.f32.mrb[0].mxu0
    %359 = vmatprep.mubr.f32.mxu0 0.0
    %360 = vmatmul.mubr.f32.gmra.mrb[0].mxu0 %v148
    %v361 = vpop.f32.mrb[0].mxu0
    %v362 = vadd.f32 %v66, %v361
    %v363 = vpop.f32.mrb[0].mxu0
    %364 = vmatprep.mubr.f32.mxu0 0.0
    %365 = vmatmul.mubr.f32.gmra.mrb[0].mxu0 %v151
    %v366 = vpop.f32.mrb[0].mxu0
    %v367 = vadd.f32 %v66, %v366
    %v368 = vpop.f32.mrb[0].mxu0
    %369 = vmatprep.mubr.f32.mxu0 0.0
    %370 = vmatmul.mubr.f32.gmra.mrb[0].mxu0 %v154
    %v371 = vpop.f32.mrb[0].mxu0
    %v372 = vadd.f32 %v66, %v371
    %v373 = vpop.f32.mrb[0].mxu0
    %374 = vmatprep.mubr.f32.mxu0 0.0
    %375 = vmatmul.mubr.f32.gmra.mrb[0].mxu0 %v157
    %v376 = vpop.f32.mrb[0].mxu0
    %v377 = vadd.f32 %v66, %v376
    %v378 = vpop.f32.mrb[0].mxu0
    %379 = vmatprep.mubr.f32.mxu0 0.0
    %380 = vmatmul.mubr.f32.gmra.mrb[0].mxu0 %v160
    %v381 = vpop.f32.mrb[0].mxu0
    %v382 = vadd.f32 %v66, %v381
    %v383 = vpop.f32.mrb[0].mxu0
    %384 = vmatprep.mubr.f32.mxu0 0.0
    %385 = vmatmul.mubr.f32.gmra.mrb[0].mxu0 %v163
    %v386 = vpop.f32.mrb[0].mxu0
    %v387 = vadd.f32 %v66, %v386
    %v388 = vpop.f32.mrb[0].mxu0
    %389 = vdwg.mxu0
    %v390 = vmax.f32 %v232, 0.0
    %v391 = vmax.f32 %v237, 0.0
    %v392 = vmax.f32 %v242, 0.0
    %v393 = vmax.f32 %v247, 0.0
    %v394 = vmax.f32 %v252, 0.0
    %v395 = vmax.f32 %v257, 0.0
    %v396 = vmax.f32 %v262, 0.0
    %v397 = vmax.f32 %v267, 0.0
    %v398 = vmax.f32 %v272, 0.0
    %v399 = vmax.f32 %v277, 0.0
    %v400 = vmax.f32 %v282, 0.0
    %v401 = vmax.f32 %v287, 0.0
    %v402 = vmax.f32 %v292, 0.0
    %v403 = vmax.f32 %v297, 0.0
    %v404 = vmax.f32 %v302, 0.0
    %v405 = vmax.f32 %v307, 0.0
    %v406 = vmax.f32 %v312, 0.0
    %v407 = vmax.f32 %v317, 0.0
    %v408 = vmax.f32 %v322, 0.0
    %v409 = vmax.f32 %v327, 0.0
    %v410 = vmax.f32 %v332, 0.0
    %v411 = vmax.f32 %v337, 0.0
    %v412 = vmax.f32 %v342, 0.0
    %v413 = vmax.f32 %v347, 0.0
    %v414 = vmax.f32 %v352, 0.0
    %v415 = vmax.f32 %v357, 0.0
    %v416 = vmax.f32 %v362, 0.0
    %v417 = vmax.f32 %v367, 0.0
    %v418 = vmax.f32 %v372, 0.0
    %v419 = vmax.f32 %v377, 0.0
    %v420 = vmax.f32 %v382, 0.0
    %v421 = vmax.f32 %v387, 0.0
    %v422 = vld [vmem:[%s3] sm:$0xff]
    %v423 = vld [vmem:[%s3 + $0x8] sm:$0xff]
    %v424 = vld [vmem:[%s3 + $0x10] sm:$0xff]
    %v425 = vld [vmem:[%s3 + $0x18] sm:$0xff]
    %v426 = vld [vmem:[%s3 + $0x20] sm:$0xff]
    %v427 = vld [vmem:[%s3 + $0x28] sm:$0xff]
    %v428 = vld [vmem:[%s3 + $0x30] sm:$0xff]
    %v429 = vld [vmem:[%s3 + $0x38] sm:$0xff]
    %v430 = vld [vmem:[%s3 + $0x40] sm:$0xff]
    %v431 = vld [vmem:[%s3 + $0x48] sm:$0xff]
    %v432 = vld [vmem:[%s3 + $0x50] sm:$0xff]
    %v433 = vld [vmem:[%s3 + $0x58] sm:$0xff]
    %v434 = vld [vmem:[%s3 + $0x60] sm:$0xff]
    %v435 = vld [vmem:[%s3 + $0x68] sm:$0xff]
    %v436 = vld [vmem:[%s3 + $0x70] sm:$0xff]
    %v437 = vld [vmem:[%s3 + $0x78] sm:$0xff]
    %v438 = vld [vmem:[%s4] sm:$0x1]
    %v440 = vlaneseq
    %v441 = vshrl.u32 %v440, 7
    %v442 = vsub.s32 0, %v441
    %v443 = vrot.slane %v438, %v442
    %445 = vmatprep.subr.mxu0 0.0
    %446 = vmatpush1.msra.mxu0 %v422
    %447 = vmatprep.subr.mxu0 0.0
    %448 = vmatpush1.msra.mxu0 %v423
    %449 = vmatprep.subr.mxu0 0.0
    %450 = vmatpush1.msra.mxu0 %v424
    %451 = vmatprep.subr.mxu0 0.0
    %452 = vmatpush1.msra.mxu0 %v425
    %453 = vmatprep.subr.mxu0 0.0
    %454 = vmatpush1.msra.mxu0 %v426
    %455 = vmatprep.subr.mxu0 0.0
    %456 = vmatpush1.msra.mxu0 %v427
    %457 = vmatprep.subr.mxu0 0.0
    %458 = vmatpush1.msra.mxu0 %v428
    %459 = vmatprep.subr.mxu0 0.0
    %460 = vmatpush1.msra.mxu0 %v429
    %461 = vmatprep.subr.mxu0 0.0
    %462 = vmatpush1.msra.mxu0 %v430
    %463 = vmatprep.subr.mxu0 0.0
    %464 = vmatpush1.msra.mxu0 %v431
    %465 = vmatprep.subr.mxu0 0.0
    %466 = vmatpush1.msra.mxu0 %v432
    %467 = vmatprep.subr.mxu0 0.0
    %468 = vmatpush1.msra.mxu0 %v433
    %469 = vmatprep.subr.mxu0 0.0
    %470 = vmatpush1.msra.mxu0 %v434
    %471 = vmatprep.subr.mxu0 0.0
    %472 = vmatpush1.msra.mxu0 %v435
    %473 = vmatprep.subr.mxu0 0.0
    %474 = vmatpush1.msra.mxu0 %v436
    %475 = vmatprep.subr.mxu0 0.0
    %476 = vmatpush1.msra.mxu0 %v437
    %477 = vmatprep.subr.mxu0 0.0
    %478 = vmatpush1.msra.mxu0 0.0
    %479 = vmatprep.subr.mxu0 0.0
    %480 = vmatpush1.msra.mxu0 0.0
    %481 = vmatprep.subr.mxu0 0.0
    %482 = vmatpush1.msra.mxu0 0.0
    %483 = vmatprep.subr.mxu0 0.0
    %484 = vmatpush1.msra.mxu0 0.0
    %485 = vmatprep.subr.mxu0 0.0
    %486 = vmatpush1.msra.mxu0 0.0
    %487 = vmatprep.subr.mxu0 0.0
    %488 = vmatpush1.msra.mxu0 0.0
    %489 = vmatprep.subr.mxu0 0.0
    %490 = vmatpush1.msra.mxu0 0.0
    %491 = vmatprep.subr.mxu0 0.0
    %492 = vmatpush1.msra.mxu0 0.0
    %493 = vmatprep.subr.mxu0 0.0
    %494 = vmatpush1.msra.mxu0 0.0
    %495 = vmatprep.subr.mxu0 0.0
    %496 = vmatpush1.msra.mxu0 0.0
    %497 = vmatprep.subr.mxu0 0.0
    %498 = vmatpush1.msra.mxu0 0.0
    %499 = vmatprep.subr.mxu0 0.0
    %500 = vmatpush1.msra.mxu0 0.0
    %501 = vmatprep.subr.mxu0 0.0
    %502 = vmatpush1.msra.mxu0 0.0
    %503 = vmatprep.subr.mxu0 0.0
    %504 = vmatpush1.msra.mxu0 0.0
    %505 = vmatprep.subr.mxu0 0.0
    %506 = vmatpush1.msra.mxu0 0.0
    %507 = vmatprep.subr.mxu0 0.0
    %508 = vmatpush1.msra.mxu0 0.0
    %509 = vmatprep.mubr.f32.mxu0 0.0
    %510 = vmatmul.mubr.f32.gmra.mrb[0].mxu0 %v390
    %v511 = vpop.f32.mrb[0].mxu0
    %v512 = vadd.f32 %v443, %v511
    %v513 = vpop.f32.mrb[0].mxu0
    %514 = vmatprep.mubr.f32.mxu0 0.0
    %515 = vmatmul.mubr.f32.gmra.mrb[0].mxu0 %v391
    %v516 = vpop.f32.mrb[0].mxu0
    %v517 = vadd.f32 %v443, %v516
    %v518 = vpop.f32.mrb[0].mxu0
    %519 = vmatprep.mubr.f32.mxu0 0.0
    %520 = vmatmul.mubr.f32.gmra.mrb[0].mxu0 %v392
    %v521 = vpop.f32.mrb[0].mxu0
    %v522 = vadd.f32 %v443, %v521
    %v523 = vpop.f32.mrb[0].mxu0
    %524 = vmatprep.mubr.f32.mxu0 0.0
    %525 = vmatmul.mubr.f32.gmra.mrb[0].mxu0 %v393
    %v526 = vpop.f32.mrb[0].mxu0
    %v527 = vadd.f32 %v443, %v526
    %v528 = vpop.f32.mrb[0].mxu0
    %529 = vmatprep.mubr.f32.mxu0 0.0
    %530 = vmatmul.mubr.f32.gmra.mrb[0].mxu0 %v394
    %v531 = vpop.f32.mrb[0].mxu0
    %v532 = vadd.f32 %v443, %v531
    %v533 = vpop.f32.mrb[0].mxu0
    %534 = vmatprep.mubr.f32.mxu0 0.0
    %535 = vmatmul.mubr.f32.gmra.mrb[0].mxu0 %v395
    %v536 = vpop.f32.mrb[0].mxu0
    %v537 = vadd.f32 %v443, %v536
    %v538 = vpop.f32.mrb[0].mxu0
    %539 = vmatprep.mubr.f32.mxu0 0.0
    %540 = vmatmul.mubr.f32.gmra.mrb[0].mxu0 %v396
    %v541 = vpop.f32.mrb[0].mxu0
    %v542 = vadd.f32 %v443, %v541
    %v543 = vpop.f32.mrb[0].mxu0
    %544 = vmatprep.mubr.f32.mxu0 0.0
    %545 = vmatmul.mubr.f32.gmra.mrb[0].mxu0 %v397
    %v546 = vpop.f32.mrb[0].mxu0
    %v547 = vadd.f32 %v443, %v546
    %v548 = vpop.f32.mrb[0].mxu0
    %549 = vmatprep.mubr.f32.mxu0 0.0
    %550 = vmatmul.mubr.f32.gmra.mrb[0].mxu0 %v398
    %v551 = vpop.f32.mrb[0].mxu0
    %v552 = vadd.f32 %v443, %v551
    %v553 = vpop.f32.mrb[0].mxu0
    %554 = vmatprep.mubr.f32.mxu0 0.0
    %555 = vmatmul.mubr.f32.gmra.mrb[0].mxu0 %v399
    %v556 = vpop.f32.mrb[0].mxu0
    %v557 = vadd.f32 %v443, %v556
    %v558 = vpop.f32.mrb[0].mxu0
    %559 = vmatprep.mubr.f32.mxu0 0.0
    %560 = vmatmul.mubr.f32.gmra.mrb[0].mxu0 %v400
    %v561 = vpop.f32.mrb[0].mxu0
    %v562 = vadd.f32 %v443, %v561
    %v563 = vpop.f32.mrb[0].mxu0
    %564 = vmatprep.mubr.f32.mxu0 0.0
    %565 = vmatmul.mubr.f32.gmra.mrb[0].mxu0 %v401
    %v566 = vpop.f32.mrb[0].mxu0
    %v567 = vadd.f32 %v443, %v566
    %v568 = vpop.f32.mrb[0].mxu0
    %569 = vmatprep.mubr.f32.mxu0 0.0
    %570 = vmatmul.mubr.f32.gmra.mrb[0].mxu0 %v402
    %v571 = vpop.f32.mrb[0].mxu0
    %v572 = vadd.f32 %v443, %v571
    %v573 = vpop.f32.mrb[0].mxu0
    %574 = vmatprep.mubr.f32.mxu0 0.0
    %575 = vmatmul.mubr.f32.gmra.mrb[0].mxu0 %v403
    %v576 = vpop.f32.mrb[0].mxu0
    %v577 = vadd.f32 %v443, %v576
    %v578 = vpop.f32.mrb[0].mxu0
    %579 = vmatprep.mubr.f32.mxu0 0.0
    %580 = vmatmul.mubr.f32.gmra.mrb[0].mxu0 %v404
    %v581 = vpop.f32.mrb[0].mxu0
    %v582 = vadd.f32 %v443, %v581
    %v583 = vpop.f32.mrb[0].mxu0
    %584 = vmatprep.mubr.f32.mxu0 0.0
    %585 = vmatmul.mubr.f32.gmra.mrb[0].mxu0 %v405
    %v586 = vpop.f32.mrb[0].mxu0
    %v587 = vadd.f32 %v443, %v586
    %v588 = vpop.f32.mrb[0].mxu0
    %589 = vmatprep.mubr.f32.mxu0 0.0
    %590 = vmatmul.mubr.f32.gmra.mrb[0].mxu0 %v406
    %v591 = vpop.f32.mrb[0].mxu0
    %v592 = vadd.f32 %v443, %v591
    %v593 = vpop.f32.mrb[0].mxu0
    %594 = vmatprep.mubr.f32.mxu0 0.0
    %595 = vmatmul.mubr.f32.gmra.mrb[0].mxu0 %v407
    %v596 = vpop.f32.mrb[0].mxu0
    %v597 = vadd.f32 %v443, %v596
    %v598 = vpop.f32.mrb[0].mxu0
    %599 = vmatprep.mubr.f32.mxu0 0.0
    %600 = vmatmul.mubr.f32.gmra.mrb[0].mxu0 %v408
    %v601 = vpop.f32.mrb[0].mxu0
    %v602 = vadd.f32 %v443, %v601
    %v603 = vpop.f32.mrb[0].mxu0
    %604 = vmatprep.mubr.f32.mxu0 0.0
    %605 = vmatmul.mubr.f32.gmra.mrb[0].mxu0 %v409
    %v606 = vpop.f32.mrb[0].mxu0
    %v607 = vadd.f32 %v443, %v606
    %v608 = vpop.f32.mrb[0].mxu0
    %609 = vmatprep.mubr.f32.mxu0 0.0
    %610 = vmatmul.mubr.f32.gmra.mrb[0].mxu0 %v410
    %v611 = vpop.f32.mrb[0].mxu0
    %v612 = vadd.f32 %v443, %v611
    %v613 = vpop.f32.mrb[0].mxu0
    %614 = vmatprep.mubr.f32.mxu0 0.0
    %615 = vmatmul.mubr.f32.gmra.mrb[0].mxu0 %v411
    %v616 = vpop.f32.mrb[0].mxu0
    %v617 = vadd.f32 %v443, %v616
    %v618 = vpop.f32.mrb[0].mxu0
    %619 = vmatprep.mubr.f32.mxu0 0.0
    %620 = vmatmul.mubr.f32.gmra.mrb[0].mxu0 %v412
    %v621 = vpop.f32.mrb[0].mxu0
    %v622 = vadd.f32 %v443, %v621
    %v623 = vpop.f32.mrb[0].mxu0
    %624 = vmatprep.mubr.f32.mxu0 0.0
    %625 = vmatmul.mubr.f32.gmra.mrb[0].mxu0 %v413
    %v626 = vpop.f32.mrb[0].mxu0
    %v627 = vadd.f32 %v443, %v626
    %v628 = vpop.f32.mrb[0].mxu0
    %629 = vmatprep.mubr.f32.mxu0 0.0
    %630 = vmatmul.mubr.f32.gmra.mrb[0].mxu0 %v414
    %v631 = vpop.f32.mrb[0].mxu0
    %v632 = vadd.f32 %v443, %v631
    %v633 = vpop.f32.mrb[0].mxu0
    %634 = vmatprep.mubr.f32.mxu0 0.0
    %635 = vmatmul.mubr.f32.gmra.mrb[0].mxu0 %v415
    %v636 = vpop.f32.mrb[0].mxu0
    %v637 = vadd.f32 %v443, %v636
    %v638 = vpop.f32.mrb[0].mxu0
    %639 = vmatprep.mubr.f32.mxu0 0.0
    %640 = vmatmul.mubr.f32.gmra.mrb[0].mxu0 %v416
    %v641 = vpop.f32.mrb[0].mxu0
    %v642 = vadd.f32 %v443, %v641
    %v643 = vpop.f32.mrb[0].mxu0
    %644 = vmatprep.mubr.f32.mxu0 0.0
    %645 = vmatmul.mubr.f32.gmra.mrb[0].mxu0 %v417
    %v646 = vpop.f32.mrb[0].mxu0
    %v647 = vadd.f32 %v443, %v646
    %v648 = vpop.f32.mrb[0].mxu0
    %649 = vmatprep.mubr.f32.mxu0 0.0
    %650 = vmatmul.mubr.f32.gmra.mrb[0].mxu0 %v418
    %v651 = vpop.f32.mrb[0].mxu0
    %v652 = vadd.f32 %v443, %v651
    %v653 = vpop.f32.mrb[0].mxu0
    %654 = vmatprep.mubr.f32.mxu0 0.0
    %655 = vmatmul.mubr.f32.gmra.mrb[0].mxu0 %v419
    %v656 = vpop.f32.mrb[0].mxu0
    %v657 = vadd.f32 %v443, %v656
    %v658 = vpop.f32.mrb[0].mxu0
    %659 = vmatprep.mubr.f32.mxu0 0.0
    %660 = vmatmul.mubr.f32.gmra.mrb[0].mxu0 %v420
    %v661 = vpop.f32.mrb[0].mxu0
    %v662 = vadd.f32 %v443, %v661
    %v663 = vpop.f32.mrb[0].mxu0
    %664 = vmatprep.mubr.f32.mxu0 0.0
    %665 = vmatmul.mubr.f32.gmra.mrb[0].mxu0 %v421
    %v666 = vpop.f32.mrb[0].mxu0
    %v667 = vadd.f32 %v443, %v666
    %v668 = vpop.f32.mrb[0].mxu0
    %669 = vdwg.mxu0
    %v670 = vmax.f32 %v512, 0.0
    %v671 = vmax.f32 %v517, 0.0
    %v672 = vmax.f32 %v522, 0.0
    %v673 = vmax.f32 %v527, 0.0
    %v674 = vmax.f32 %v532, 0.0
    %v675 = vmax.f32 %v537, 0.0
    %v676 = vmax.f32 %v542, 0.0
    %v677 = vmax.f32 %v547, 0.0
    %v678 = vmax.f32 %v552, 0.0
    %v679 = vmax.f32 %v557, 0.0
    %v680 = vmax.f32 %v562, 0.0
    %v681 = vmax.f32 %v567, 0.0
    %v682 = vmax.f32 %v572, 0.0
    %v683 = vmax.f32 %v577, 0.0
    %v684 = vmax.f32 %v582, 0.0
    %v685 = vmax.f32 %v587, 0.0
    %v686 = vmax.f32 %v592, 0.0
    %v687 = vmax.f32 %v597, 0.0
    %v688 = vmax.f32 %v602, 0.0
    %v689 = vmax.f32 %v607, 0.0
    %v690 = vmax.f32 %v612, 0.0
    %v691 = vmax.f32 %v617, 0.0
    %v692 = vmax.f32 %v622, 0.0
    %v693 = vmax.f32 %v627, 0.0
    %v694 = vmax.f32 %v632, 0.0
    %v695 = vmax.f32 %v637, 0.0
    %v696 = vmax.f32 %v642, 0.0
    %v697 = vmax.f32 %v647, 0.0
    %v698 = vmax.f32 %v652, 0.0
    %v699 = vmax.f32 %v657, 0.0
    %v700 = vmax.f32 %v662, 0.0
    %v701 = vmax.f32 %v667, 0.0
    %v702 = vld [vmem:[%s5] sm:$0xff]
    %v703 = vld [vmem:[%s5 + $0x8] sm:$0xff]
    %v704 = vld [vmem:[%s5 + $0x10] sm:$0xff]
    %v705 = vld [vmem:[%s5 + $0x18] sm:$0xff]
    %v706 = vld [vmem:[%s5 + $0x20] sm:$0xff]
    %v707 = vld [vmem:[%s5 + $0x28] sm:$0xff]
    %v708 = vld [vmem:[%s5 + $0x30] sm:$0xff]
    %v709 = vld [vmem:[%s5 + $0x38] sm:$0xff]
    %v710 = vld [vmem:[%s5 + $0x40] sm:$0xff]
    %v711 = vld [vmem:[%s5 + $0x48] sm:$0xff]
    %v712 = vld [vmem:[%s5 + $0x50] sm:$0xff]
    %v713 = vld [vmem:[%s5 + $0x58] sm:$0xff]
    %v714 = vld [vmem:[%s5 + $0x60] sm:$0xff]
    %v715 = vld [vmem:[%s5 + $0x68] sm:$0xff]
    %v716 = vld [vmem:[%s5 + $0x70] sm:$0xff]
    %v717 = vld [vmem:[%s5 + $0x78] sm:$0xff]
    %v718 = vld [vmem:[%s6] sm:$0x1]
    %v720 = vlaneseq
    %v721 = vshrl.u32 %v720, 7
    %v722 = vsub.s32 0, %v721
    %v723 = vrot.slane %v718, %v722
    %725 = vmatprep.subr.mxu0 0.0
    %726 = vmatpush1.msra.mxu0 %v702
    %727 = vmatprep.subr.mxu0 0.0
    %728 = vmatpush1.msra.mxu0 %v703
    %729 = vmatprep.subr.mxu0 0.0
    %730 = vmatpush1.msra.mxu0 %v704
    %731 = vmatprep.subr.mxu0 0.0
    %732 = vmatpush1.msra.mxu0 %v705
    %733 = vmatprep.subr.mxu0 0.0
    %734 = vmatpush1.msra.mxu0 %v706
    %735 = vmatprep.subr.mxu0 0.0
    %736 = vmatpush1.msra.mxu0 %v707
    %737 = vmatprep.subr.mxu0 0.0
    %738 = vmatpush1.msra.mxu0 %v708
    %739 = vmatprep.subr.mxu0 0.0
    %740 = vmatpush1.msra.mxu0 %v709
    %741 = vmatprep.subr.mxu0 0.0
    %742 = vmatpush1.msra.mxu0 %v710
    %743 = vmatprep.subr.mxu0 0.0
    %744 = vmatpush1.msra.mxu0 %v711
    %745 = vmatprep.subr.mxu0 0.0
    %746 = vmatpush1.msra.mxu0 %v712
    %747 = vmatprep.subr.mxu0 0.0
    %748 = vmatpush1.msra.mxu0 %v713
    %749 = vmatprep.subr.mxu0 0.0
    %750 = vmatpush1.msra.mxu0 %v714
    %751 = vmatprep.subr.mxu0 0.0
    %752 = vmatpush1.msra.mxu0 %v715
    %753 = vmatprep.subr.mxu0 0.0
    %754 = vmatpush1.msra.mxu0 %v716
    %755 = vmatprep.subr.mxu0 0.0
    %756 = vmatpush1.msra.mxu0 %v717
    %757 = vmatprep.subr.mxu0 0.0
    %758 = vmatpush1.msra.mxu0 0.0
    %759 = vmatprep.subr.mxu0 0.0
    %760 = vmatpush1.msra.mxu0 0.0
    %761 = vmatprep.subr.mxu0 0.0
    %762 = vmatpush1.msra.mxu0 0.0
    %763 = vmatprep.subr.mxu0 0.0
    %764 = vmatpush1.msra.mxu0 0.0
    %765 = vmatprep.subr.mxu0 0.0
    %766 = vmatpush1.msra.mxu0 0.0
    %767 = vmatprep.subr.mxu0 0.0
    %768 = vmatpush1.msra.mxu0 0.0
    %769 = vmatprep.subr.mxu0 0.0
    %770 = vmatpush1.msra.mxu0 0.0
    %771 = vmatprep.subr.mxu0 0.0
    %772 = vmatpush1.msra.mxu0 0.0
    %773 = vmatprep.subr.mxu0 0.0
    %774 = vmatpush1.msra.mxu0 0.0
    %775 = vmatprep.subr.mxu0 0.0
    %776 = vmatpush1.msra.mxu0 0.0
    %777 = vmatprep.subr.mxu0 0.0
    %778 = vmatpush1.msra.mxu0 0.0
    %779 = vmatprep.subr.mxu0 0.0
    %780 = vmatpush1.msra.mxu0 0.0
    %781 = vmatprep.subr.mxu0 0.0
    %782 = vmatpush1.msra.mxu0 0.0
    %783 = vmatprep.subr.mxu0 0.0
    %784 = vmatpush1.msra.mxu0 0.0
    %785 = vmatprep.subr.mxu0 0.0
    %786 = vmatpush1.msra.mxu0 0.0
    %787 = vmatprep.subr.mxu0 0.0
    %788 = vmatpush1.msra.mxu0 0.0
    %789 = vmatprep.mubr.f32.mxu0 0.0
    %790 = vmatmul.mubr.f32.gmra.mrb[0].mxu0 %v670
    %v791 = vpop.f32.mrb[0].mxu0
    %v792 = vadd.f32 %v723, %v791
    %v793 = vpop.f32.mrb[0].mxu0
    %794 = vmatprep.mubr.f32.mxu0 0.0
    %795 = vmatmul.mubr.f32.gmra.mrb[0].mxu0 %v671
    %v796 = vpop.f32.mrb[0].mxu0
    %v797 = vadd.f32 %v723, %v796
    %v798 = vpop.f32.mrb[0].mxu0
    %799 = vmatprep.mubr.f32.mxu0 0.0
    %800 = vmatmul.mubr.f32.gmra.mrb[0].mxu0 %v672
    %v801 = vpop.f32.mrb[0].mxu0
    %v802 = vadd.f32 %v723, %v801
    %v803 = vpop.f32.mrb[0].mxu0
    %804 = vmatprep.mubr.f32.mxu0 0.0
    %805 = vmatmul.mubr.f32.gmra.mrb[0].mxu0 %v673
    %v806 = vpop.f32.mrb[0].mxu0
    %v807 = vadd.f32 %v723, %v806
    %v808 = vpop.f32.mrb[0].mxu0
    %809 = vmatprep.mubr.f32.mxu0 0.0
    %810 = vmatmul.mubr.f32.gmra.mrb[0].mxu0 %v674
    %v811 = vpop.f32.mrb[0].mxu0
    %v812 = vadd.f32 %v723, %v811
    %v813 = vpop.f32.mrb[0].mxu0
    %814 = vmatprep.mubr.f32.mxu0 0.0
    %815 = vmatmul.mubr.f32.gmra.mrb[0].mxu0 %v675
    %v816 = vpop.f32.mrb[0].mxu0
    %v817 = vadd.f32 %v723, %v816
    %v818 = vpop.f32.mrb[0].mxu0
    %819 = vmatprep.mubr.f32.mxu0 0.0
    %820 = vmatmul.mubr.f32.gmra.mrb[0].mxu0 %v676
    %v821 = vpop.f32.mrb[0].mxu0
    %v822 = vadd.f32 %v723, %v821
    %v823 = vpop.f32.mrb[0].mxu0
    %824 = vmatprep.mubr.f32.mxu0 0.0
    %825 = vmatmul.mubr.f32.gmra.mrb[0].mxu0 %v677
    %v826 = vpop.f32.mrb[0].mxu0
    %v827 = vadd.f32 %v723, %v826
    %v828 = vpop.f32.mrb[0].mxu0
    %829 = vmatprep.mubr.f32.mxu0 0.0
    %830 = vmatmul.mubr.f32.gmra.mrb[0].mxu0 %v678
    %v831 = vpop.f32.mrb[0].mxu0
    %v832 = vadd.f32 %v723, %v831
    %v833 = vpop.f32.mrb[0].mxu0
    %834 = vmatprep.mubr.f32.mxu0 0.0
    %835 = vmatmul.mubr.f32.gmra.mrb[0].mxu0 %v679
    %v836 = vpop.f32.mrb[0].mxu0
    %v837 = vadd.f32 %v723, %v836
    %v838 = vpop.f32.mrb[0].mxu0
    %839 = vmatprep.mubr.f32.mxu0 0.0
    %840 = vmatmul.mubr.f32.gmra.mrb[0].mxu0 %v680
    %v841 = vpop.f32.mrb[0].mxu0
    %v842 = vadd.f32 %v723, %v841
    %v843 = vpop.f32.mrb[0].mxu0
    %844 = vmatprep.mubr.f32.mxu0 0.0
    %845 = vmatmul.mubr.f32.gmra.mrb[0].mxu0 %v681
    %v846 = vpop.f32.mrb[0].mxu0
    %v847 = vadd.f32 %v723, %v846
    %v848 = vpop.f32.mrb[0].mxu0
    %849 = vmatprep.mubr.f32.mxu0 0.0
    %850 = vmatmul.mubr.f32.gmra.mrb[0].mxu0 %v682
    %v851 = vpop.f32.mrb[0].mxu0
    %v852 = vadd.f32 %v723, %v851
    %v853 = vpop.f32.mrb[0].mxu0
    %854 = vmatprep.mubr.f32.mxu0 0.0
    %855 = vmatmul.mubr.f32.gmra.mrb[0].mxu0 %v683
    %v856 = vpop.f32.mrb[0].mxu0
    %v857 = vadd.f32 %v723, %v856
    %v858 = vpop.f32.mrb[0].mxu0
    %859 = vmatprep.mubr.f32.mxu0 0.0
    %860 = vmatmul.mubr.f32.gmra.mrb[0].mxu0 %v684
    %v861 = vpop.f32.mrb[0].mxu0
    %v862 = vadd.f32 %v723, %v861
    %v863 = vpop.f32.mrb[0].mxu0
    %864 = vmatprep.mubr.f32.mxu0 0.0
    %865 = vmatmul.mubr.f32.gmra.mrb[0].mxu0 %v685
    %v866 = vpop.f32.mrb[0].mxu0
    %v867 = vadd.f32 %v723, %v866
    %v868 = vpop.f32.mrb[0].mxu0
    %869 = vmatprep.mubr.f32.mxu0 0.0
    %870 = vmatmul.mubr.f32.gmra.mrb[0].mxu0 %v686
    %v871 = vpop.f32.mrb[0].mxu0
    %v872 = vadd.f32 %v723, %v871
    %v873 = vpop.f32.mrb[0].mxu0
    %874 = vmatprep.mubr.f32.mxu0 0.0
    %875 = vmatmul.mubr.f32.gmra.mrb[0].mxu0 %v687
    %v876 = vpop.f32.mrb[0].mxu0
    %v877 = vadd.f32 %v723, %v876
    %v878 = vpop.f32.mrb[0].mxu0
    %879 = vmatprep.mubr.f32.mxu0 0.0
    %880 = vmatmul.mubr.f32.gmra.mrb[0].mxu0 %v688
    %v881 = vpop.f32.mrb[0].mxu0
    %v882 = vadd.f32 %v723, %v881
    %v883 = vpop.f32.mrb[0].mxu0
    %884 = vmatprep.mubr.f32.mxu0 0.0
    %885 = vmatmul.mubr.f32.gmra.mrb[0].mxu0 %v689
    %v886 = vpop.f32.mrb[0].mxu0
    %v887 = vadd.f32 %v723, %v886
    %v888 = vpop.f32.mrb[0].mxu0
    %889 = vmatprep.mubr.f32.mxu0 0.0
    %890 = vmatmul.mubr.f32.gmra.mrb[0].mxu0 %v690
    %v891 = vpop.f32.mrb[0].mxu0
    %v892 = vadd.f32 %v723, %v891
    %v893 = vpop.f32.mrb[0].mxu0
    %894 = vmatprep.mubr.f32.mxu0 0.0
    %895 = vmatmul.mubr.f32.gmra.mrb[0].mxu0 %v691
    %v896 = vpop.f32.mrb[0].mxu0
    %v897 = vadd.f32 %v723, %v896
    %v898 = vpop.f32.mrb[0].mxu0
    %899 = vmatprep.mubr.f32.mxu0 0.0
    %900 = vmatmul.mubr.f32.gmra.mrb[0].mxu0 %v692
    %v901 = vpop.f32.mrb[0].mxu0
    %v902 = vadd.f32 %v723, %v901
    %v903 = vpop.f32.mrb[0].mxu0
    %904 = vmatprep.mubr.f32.mxu0 0.0
    %905 = vmatmul.mubr.f32.gmra.mrb[0].mxu0 %v693
    %v906 = vpop.f32.mrb[0].mxu0
    %v907 = vadd.f32 %v723, %v906
    %v908 = vpop.f32.mrb[0].mxu0
    %909 = vmatprep.mubr.f32.mxu0 0.0
    %910 = vmatmul.mubr.f32.gmra.mrb[0].mxu0 %v694
    %v911 = vpop.f32.mrb[0].mxu0
    %v912 = vadd.f32 %v723, %v911
    %v913 = vpop.f32.mrb[0].mxu0
    %914 = vmatprep.mubr.f32.mxu0 0.0
    %915 = vmatmul.mubr.f32.gmra.mrb[0].mxu0 %v695
    %v916 = vpop.f32.mrb[0].mxu0
    %v917 = vadd.f32 %v723, %v916
    %v918 = vpop.f32.mrb[0].mxu0
    %919 = vmatprep.mubr.f32.mxu0 0.0
    %920 = vmatmul.mubr.f32.gmra.mrb[0].mxu0 %v696
    %v921 = vpop.f32.mrb[0].mxu0
    %v922 = vadd.f32 %v723, %v921
    %v923 = vpop.f32.mrb[0].mxu0
    %924 = vmatprep.mubr.f32.mxu0 0.0
    %925 = vmatmul.mubr.f32.gmra.mrb[0].mxu0 %v697
    %v926 = vpop.f32.mrb[0].mxu0
    %v927 = vadd.f32 %v723, %v926
    %v928 = vpop.f32.mrb[0].mxu0
    %929 = vmatprep.mubr.f32.mxu0 0.0
    %930 = vmatmul.mubr.f32.gmra.mrb[0].mxu0 %v698
    %v931 = vpop.f32.mrb[0].mxu0
    %v932 = vadd.f32 %v723, %v931
    %v933 = vpop.f32.mrb[0].mxu0
    %934 = vmatprep.mubr.f32.mxu0 0.0
    %935 = vmatmul.mubr.f32.gmra.mrb[0].mxu0 %v699
    %v936 = vpop.f32.mrb[0].mxu0
    %v937 = vadd.f32 %v723, %v936
    %v938 = vpop.f32.mrb[0].mxu0
    %939 = vmatprep.mubr.f32.mxu0 0.0
    %940 = vmatmul.mubr.f32.gmra.mrb[0].mxu0 %v700
    %v941 = vpop.f32.mrb[0].mxu0
    %v942 = vadd.f32 %v723, %v941
    %v943 = vpop.f32.mrb[0].mxu0
    %944 = vmatprep.mubr.f32.mxu0 0.0
    %945 = vmatmul.mubr.f32.gmra.mrb[0].mxu0 %v701
    %v946 = vpop.f32.mrb[0].mxu0
    %v947 = vadd.f32 %v723, %v946
    %v948 = vpop.f32.mrb[0].mxu0
    %949 = vdwg.mxu0
    %950 = vst [vmem:[#allocation2] sm:$0xff] %v792
    %951 = vst [vmem:[#allocation2 + $0x8] sm:$0xff] %v797
    %952 = vst [vmem:[#allocation2 + $0x10] sm:$0xff] %v802
    %953 = vst [vmem:[#allocation2 + $0x18] sm:$0xff] %v807
    %954 = vst [vmem:[#allocation2 + $0x20] sm:$0xff] %v812
    %955 = vst [vmem:[#allocation2 + $0x28] sm:$0xff] %v817
    %956 = vst [vmem:[#allocation2 + $0x30] sm:$0xff] %v822
    %957 = vst [vmem:[#allocation2 + $0x38] sm:$0xff] %v827
    %958 = vst [vmem:[#allocation2 + $0x40] sm:$0xff] %v832
    %959 = vst [vmem:[#allocation2 + $0x48] sm:$0xff] %v837
    %960 = vst [vmem:[#allocation2 + $0x50] sm:$0xff] %v842
    %961 = vst [vmem:[#allocation2 + $0x58] sm:$0xff] %v847
    %962 = vst [vmem:[#allocation2 + $0x60] sm:$0xff] %v852
    %963 = vst [vmem:[#allocation2 + $0x68] sm:$0xff] %v857
    %964 = vst [vmem:[#allocation2 + $0x70] sm:$0xff] %v862
    %965 = vst [vmem:[#allocation2 + $0x78] sm:$0xff] %v867
    %966 = vst [vmem:[#allocation2 + $0x80] sm:$0xff] %v872
    %967 = vst [vmem:[#allocation2 + $0x88] sm:$0xff] %v877
    %968 = vst [vmem:[#allocation2 + $0x90] sm:$0xff] %v882
    %969 = vst [vmem:[#allocation2 + $0x98] sm:$0xff] %v887
    %970 = vst [vmem:[#allocation2 + $0xa0] sm:$0xff] %v892
    %971 = vst [vmem:[#allocation2 + $0xa8] sm:$0xff] %v897
    %972 = vst [vmem:[#allocation2 + $0xb0] sm:$0xff] %v902
    %973 = vst [vmem:[#allocation2 + $0xb8] sm:$0xff] %v907
    %974 = vst [vmem:[#allocation2 + $0xc0] sm:$0xff] %v912
    %975 = vst [vmem:[#allocation2 + $0xc8] sm:$0xff] %v917
    %976 = vst [vmem:[#allocation2 + $0xd0] sm:$0xff] %v922
    %977 = vst [vmem:[#allocation2 + $0xd8] sm:$0xff] %v927
    %978 = vst [vmem:[#allocation2 + $0xe0] sm:$0xff] %v932
    %979 = vst [vmem:[#allocation2 + $0xe8] sm:$0xff] %v937
    %980 = vst [vmem:[#allocation2 + $0xf0] sm:$0xff] %v942
    %981 = vst [vmem:[#allocation2 + $0xf8] sm:$0xff] %v947
    // Predicated region
    $region30: #{tpu_custom_call.1} parent=1 // pred_check
      _
    $region31: #{tpu_custom_call.1} parent=1 // pred_check_branch
      %983 = sbr.rel (0) target = $region33
    $region32: #{tpu_custom_call.1} parent=1 // pred_region
      %s985 = ssub.s32 4096, 4096
      %986 = vsyncadd [#allocation3], %s985
      %s987 = sshll.u32 [#allocation2], 4
      %s988 = int_to_ptr.vmem [resolvable:$true] %s987
      %993 = dma.vmem_to_hbm [thread:$0]  %s988, 4096, %s7, [#allocation3], 128, 128, 8
    $region33: #{tpu_custom_call.1} parent=1 // pred_fallthru
      _
    // Predicated region
    $region34: #{tpu_custom_call.1} parent=1 // pred_check
      _
    $region35: #{tpu_custom_call.1} parent=1 // pred_check_branch
      %995 = sbr.rel (0) target = $region37
    $region36: #{tpu_custom_call.1} parent=1 // pred_region
      %996 = dma.done [#allocation3], 4096
    $region37: #{tpu_custom_call.1} parent=1 // pred_fallthru
      _
    %997 = vsyncpa [#allocation3], 1

</llo_original>
